<compile_context>
chip_gen: v6e
topology: v6e:2x2x1
jax: 0.10.0
libtpu: 0.0.40
codegen_flags: <defaults>
</compile_context>

<pallas_src>
import jax
import jax.numpy as jnp
from jax.experimental import pallas as pl
from jax.experimental.pallas import tpu as pltpu

EPS = 1e-5


def _bn_kernel(x_ref, w_ref, b_ref, o_ref):
    # x_ref: (Cb, L)  — channels on sublanes, reduction axis L on lanes.
    # w_ref, b_ref: (Cb, 1) per-channel affine params.
    x = x_ref[...].astype(jnp.float32)
    inv_n = 1.0 / x.shape[1]

    # Two-pass statistics (better numerics than E[x^2]-E[x]^2, tile is resident).
    mean = jnp.sum(x, axis=1, keepdims=True) * inv_n            # (Cb, 1)
    centered = x - mean
    var = jnp.sum(centered * centered, axis=1, keepdims=True) * inv_n

    inv_std = jax.lax.rsqrt(var + EPS)                          # EUP
    scale = inv_std * w_ref[...].astype(jnp.float32)            # (Cb, 1)
    bias = b_ref[...].astype(jnp.float32)                       # (Cb, 1)

    # y = (x - mean) * inv_std * w + b
    o_ref[...] = (centered * scale + bias).astype(o_ref.dtype)


def batchnorm2d_pallas(x_nchw, weight, bias):
    """BatchNorm2d forward with batch statistics (PyTorch training-mode)."""
    N, C, H, W = x_nchw.shape
    L = N * H * W

    if N == 1:
        # (1, C, H, W) -> (C, H*W): a free, contiguous reshape of NCHW.
        x_cl = x_nchw.reshape(C, L)
    else:
        # General fallback (not the module's case): channels-first slab.
        x_cl = jnp.transpose(x_nchw, (1, 0, 2, 3)).reshape(C, L)

    w2 = weight.reshape(C, 1)
    b2 = bias.reshape(C, 1)

    # Split C into 2 parallel blocks when sublane-aligned (1392 -> 2 x 696):
    # shards across v7x's two TensorCores and overlaps DMA on v5e.
    num_blocks = 2 if (C % 2 == 0 and (C // 2) % 8 == 0) else 1
    cb = C // num_blocks

    y_cl = pl.pallas_call(
        _bn_kernel,
        out_shape=jax.ShapeDtypeStruct((C, L), x_nchw.dtype),
        grid=(num_blocks,),
        in_specs=[
            pl.BlockSpec((cb, L), lambda i: (i, 0)),
            pl.BlockSpec((cb, 1), lambda i: (i, 0)),
            pl.BlockSpec((cb, 1), lambda i: (i, 0)),
        ],
        out_specs=pl.BlockSpec((cb, L), lambda i: (i, 0)),
        compiler_params=pltpu.CompilerParams(
            dimension_semantics=("parallel",)),
    )(x_cl, w2, b2)

    if N == 1:
        return y_cl.reshape(N, C, H, W)
    return jnp.transpose(y_cl.reshape(C, N, H, W), (1, 0, 2, 3))


def batchnorm2d_ref(x_nchw, weight, bias):
    mean = jnp.mean(x_nchw, axis=(0, 2, 3), keepdims=True)
    var = jnp.mean((x_nchw - mean) ** 2, axis=(0, 2, 3), keepdims=True)
    w = weight.reshape(1, -1, 1, 1)
    b = bias.reshape(1, -1, 1, 1)
    return (x_nchw - mean) * jax.lax.rsqrt(var + EPS) * w + b


if __name__ == "__main__":
    key = jax.random.PRNGKey(0)
    kx, kw, kb = jax.random.split(key, 3)

    N, C, H, W = 1, 1392, 7, 7
    x = jax.random.normal(kx, (N, C, H, W), dtype=jnp.float32)
    # Non-trivial affine params so the scale/shift path is exercised.
    weight = 1.0 + 0.1 * jax.random.normal(kw, (C,), dtype=jnp.float32)
    bias = 0.1 * jax.random.normal(kb, (C,), dtype=jnp.float32)

    out = batchnorm2d_pallas(x, weight, bias)
    out = jax.block_until_ready(out)

    ref = batchnorm2d_ref(x, weight, bias)
    assert out.shape == (N, C, H, W)
    assert jnp.allclose(out, ref, atol=1e-4, rtol=1e-4)

    print("KERNEL_OK")
</pallas_src>

<mosaic_0001>
module attributes {stable_mosaic.version = 11 : i64} {
  func.func @_bn_kernel(%arg0: i32, %arg1: memref<696x49xf32, #tpu.memory_space<vmem>>, %arg2: memref<696x1xf32, #tpu.memory_space<vmem>>, %arg3: memref<696x1xf32, #tpu.memory_space<vmem>>, %arg4: memref<696x49xf32, #tpu.memory_space<vmem>>) attributes {dimension_semantics = [#tpu.dimension_semantics<parallel>], iteration_bounds = array<i64: 2>, scalar_prefetch = 0 : i64, scratch_operands = 0 : i64, tpu.core_type = #tpu.core_type<tc>, window_params = [{transform_indices = @transform_0, window_bounds = array<i64: 696, 49>}, {transform_indices = @transform_1, window_bounds = array<i64: 696, 1>}, {transform_indices = @transform_2, window_bounds = array<i64: 696, 1>}, {transform_indices = @transform_3, window_bounds = array<i64: 696, 49>}]} {
    %c0 = arith.constant 0 : index
    %c0_0 = arith.constant 0 : index
    %0 = vector.load %arg1[%c0, %c0_0] : memref<696x49xf32, #tpu.memory_space<vmem>>, vector<696x49xf32>
    %cst = arith.constant dense<0.000000e+00> : vector<696xf32>
    %1 = vector.multi_reduction <add>, %0, %cst [1] : vector<696x49xf32> to vector<696xf32>
    %2 = vector.shape_cast %1 : vector<696xf32> to vector<696x1xf32>
    %cst_1 = arith.constant 0.0204081628 : f32
    %3 = vector.broadcast %cst_1 : f32 to vector<696x1xf32>
    %4 = arith.mulf %2, %3 : vector<696x1xf32>
    %5 = vector.broadcast %4 : vector<696x1xf32> to vector<696x49xf32>
    %6 = arith.subf %0, %5 : vector<696x49xf32>
    %7 = arith.mulf %6, %6 : vector<696x49xf32>
    %cst_2 = arith.constant dense<0.000000e+00> : vector<696xf32>
    %8 = vector.multi_reduction <add>, %7, %cst_2 [1] : vector<696x49xf32> to vector<696xf32>
    %9 = vector.shape_cast %8 : vector<696xf32> to vector<696x1xf32>
    %cst_3 = arith.constant 0.0204081628 : f32
    %10 = vector.broadcast %cst_3 : f32 to vector<696x1xf32>
    %11 = arith.mulf %9, %10 : vector<696x1xf32>
    %cst_4 = arith.constant 9.99999974E-6 : f32
    %12 = vector.broadcast %cst_4 : f32 to vector<696x1xf32>
    %13 = arith.addf %11, %12 : vector<696x1xf32>
    %14 = math.rsqrt %13 : vector<696x1xf32>
    %c0_5 = arith.constant 0 : index
    %c0_6 = arith.constant 0 : index
    %15 = vector.load %arg2[%c0_5, %c0_6] : memref<696x1xf32, #tpu.memory_space<vmem>>, vector<696x1xf32>
    %16 = arith.mulf %14, %15 : vector<696x1xf32>
    %c0_7 = arith.constant 0 : index
    %c0_8 = arith.constant 0 : index
    %17 = vector.load %arg3[%c0_7, %c0_8] : memref<696x1xf32, #tpu.memory_space<vmem>>, vector<696x1xf32>
    %18 = vector.broadcast %16 : vector<696x1xf32> to vector<696x49xf32>
    %19 = arith.mulf %6, %18 : vector<696x49xf32>
    %20 = vector.broadcast %17 : vector<696x1xf32> to vector<696x49xf32>
    %21 = arith.addf %19, %20 : vector<696x49xf32>
    %c0_9 = arith.constant 0 : index
    %c0_10 = arith.constant 0 : index
    %22 = vector.load %arg4[%c0_9, %c0_10] : memref<696x49xf32, #tpu.memory_space<vmem>>, vector<696x49xf32>
    tpu.vector_store %arg4[%c0_9, %c0_10], %21 {strides = array<i32>} : memref<696x49xf32, #tpu.memory_space<vmem>>, vector<696x49xf32>,
    return
  }
  func.func @transform_0(%arg0: i32) -> (i32, i32) {
    %c0_i32 = arith.constant 0 : i32
    %c0_i32_0 = arith.constant 0 : i32
    return %arg0, %c0_i32 : i32, i32
  }
  func.func @transform_1(%arg0: i32) -> (i32, i32) {
    %c0_i32 = arith.constant 0 : i32
    %c0_i32_0 = arith.constant 0 : i32
    return %arg0, %c0_i32 : i32, i32
  }
  func.func @transform_2(%arg0: i32) -> (i32, i32) {
    %c0_i32 = arith.constant 0 : i32
    %c0_i32_0 = arith.constant 0 : i32
    return %arg0, %c0_i32 : i32, i32
  }
  func.func @transform_3(%arg0: i32) -> (i32, i32) {
    %c0_i32 = arith.constant 0 : i32
    %c0_i32_0 = arith.constant 0 : i32
    return %arg0, %c0_i32 : i32, i32
  }
}

</mosaic_0001>

<llo_original>
// kernel: tpu_custom_call.1
$region0: #{tpu_custom_call.1}
  #allocation0 [shape = 'u32[]', space=smem, size = 0x4, offset = 0x4, fixed_abs, tag = 'smem constant byte address 0x4 - core index']
  #allocation1 [shape = 'u32[144,128]{1,0:T(1,128)}', space=vmem, size = 0x12000, scoped, tag = 'internal scratch']
  %s0 = inlined_call_operand.vmem [shape: f32[1392,49], index: 0, kind: input, shape index: {}]
  %s1 = inlined_call_operand.vmem [shape: f32[1392,1], index: 1, kind: input, shape index: {}]
  %s2 = inlined_call_operand.vmem [shape: f32[1392,1], index: 2, kind: input, shape index: {}]
  %s3 = inlined_call_operand.vmem [shape: f32[1392,49], index: 3, kind: output, shape index: {}]
  %s4 = sld [smem:[#allocation0]]
  $region45: #{tpu_custom_call.1} parent=0
    _
  %s6 = ssub.s32 1, %s4
  %s7 = scalar_select 0, %s6, %s4
  loop: start=0, step=1, limit=4
  $region2: #{tpu_custom_call.1} parent=0 // loop_pre_header
    _
  $region3: #{tpu_custom_call.1} parent=0 // loop_header
    %s9 = sphi 0, %s13
    %p10 = scmp.ge.s32.totalorder %s9, 4
    %s19 = sphi 0, %s21
    %s22 = sphi 0, %s19
    %s23 = sphi 0, %s22
    %s39 = sphi 0, %s23
    %s45 = sphi 0, %s47
    %s48 = sphi 0, %s45
    %s49 = sphi 0, %s48
    %s65 = sphi 0, %s49
    %s71 = sphi 0, %s73
    %s74 = sphi 0, %s71
    %s75 = sphi 0, %s74
    %s91 = sphi 0, %s75
    %s97 = sphi 0, %s99
    %s100 = sphi 0, %s97
    %s101 = sphi 0, %s100
    %s117 = sphi 0, %s101
  $region4: #{tpu_custom_call.1} parent=0 // loop_header_branch
    %12 = sbr.rel (%p10) target = $region8
  $region5: #{tpu_custom_call.1} parent=0 // loop_body
    %s14 = ssub.s32 %s9, 1
    %s15 = ssub.s32 %s9, 2
    %s16 = sadd.s32 %s9, 1
    %s17 = ssub.s32 %s9, %s16
    %p18 = scmp.eq.s32.totalorder %s17, 0
    %s20 = sadd.s32 %s19, 1
    %s21 = scalar_select %p18, %s19, %s20
    %p24 = pneg %p18
    %p25 = scmp.eq.s32.totalorder %s9, 1
    %p26 = por %p24, %p25
    %p27 = scmp.ne.s32.totalorder %s19, %s22
    %p28 = scmp.eq.s32.totalorder %s9, 0
    %p29 = por %p27, %p28
    %p30 = scmp.ne.s32.totalorder %s19, %s22
    %p31 = scmp.eq.s32.totalorder %s14, 1
    %p32 = por %p30, %p31
    %p33 = scmp.ne.s32.totalorder %s22, %s23
    %p34 = scmp.eq.s32.totalorder %s14, 0
    %p35 = por %p33, %p34
    %p36 = scmp.ne.s32.totalorder %s22, %s23
    %p37 = scmp.eq.s32.totalorder %s15, 1
    %p38 = por %p36, %p37
    %p40 = scmp.ne.s32.totalorder %s23, %s39
    %p41 = scmp.eq.s32.totalorder %s15, 0
    %p42 = por %p40, %p41
    %s43 = ssub.s32 %s9, %s16
    %p44 = scmp.eq.s32.totalorder %s43, 0
    %s46 = sadd.s32 %s45, 1
    %s47 = scalar_select %p44, %s45, %s46
    %p50 = pneg %p44
    %p51 = scmp.eq.s32.totalorder %s9, 1
    %p52 = por %p50, %p51
    %p53 = scmp.ne.s32.totalorder %s45, %s48
    %p54 = scmp.eq.s32.totalorder %s9, 0
    %p55 = por %p53, %p54
    %p56 = scmp.ne.s32.totalorder %s45, %s48
    %p57 = scmp.eq.s32.totalorder %s14, 1
    %p58 = por %p56, %p57
    %p59 = scmp.ne.s32.totalorder %s48, %s49
    %p60 = scmp.eq.s32.totalorder %s14, 0
    %p61 = por %p59, %p60
    %p62 = scmp.ne.s32.totalorder %s48, %s49
    %p63 = scmp.eq.s32.totalorder %s15, 1
    %p64 = por %p62, %p63
    %p66 = scmp.ne.s32.totalorder %s49, %s65
    %p67 = scmp.eq.s32.totalorder %s15, 0
    %p68 = por %p66, %p67
    %s69 = ssub.s32 %s9, %s16
    %p70 = scmp.eq.s32.totalorder %s69, 0
    %s72 = sadd.s32 %s71, 1
    %s73 = scalar_select %p70, %s71, %s72
    %p76 = pneg %p70
    %p77 = scmp.eq.s32.totalorder %s9, 1
    %p78 = por %p76, %p77
    %p79 = scmp.ne.s32.totalorder %s71, %s74
    %p80 = scmp.eq.s32.totalorder %s9, 0
    %p81 = por %p79, %p80
    %p82 = scmp.ne.s32.totalorder %s71, %s74
    %p83 = scmp.eq.s32.totalorder %s14, 1
    %p84 = por %p82, %p83
    %p85 = scmp.ne.s32.totalorder %s74, %s75
    %p86 = scmp.eq.s32.totalorder %s14, 0
    %p87 = por %p85, %p86
    %p88 = scmp.ne.s32.totalorder %s74, %s75
    %p89 = scmp.eq.s32.totalorder %s15, 1
    %p90 = por %p88, %p89
    %p92 = scmp.ne.s32.totalorder %s75, %s91
    %p93 = scmp.eq.s32.totalorder %s15, 0
    %p94 = por %p92, %p93
    %s95 = ssub.s32 %s9, %s16
    %p96 = scmp.eq.s32.totalorder %s95, 0
    %s98 = sadd.s32 %s97, 1
    %s99 = scalar_select %p96, %s97, %s98
    %p102 = pneg %p96
    %p103 = scmp.eq.s32.totalorder %s9, 1
    %p104 = por %p102, %p103
    %p105 = scmp.ne.s32.totalorder %s97, %s100
    %p106 = scmp.eq.s32.totalorder %s9, 0
    %p107 = por %p105, %p106
    %p108 = scmp.ne.s32.totalorder %s97, %s100
    %p109 = scmp.eq.s32.totalorder %s14, 1
    %p110 = por %p108, %p109
    %p111 = scmp.ne.s32.totalorder %s100, %s101
    %p112 = scmp.eq.s32.totalorder %s14, 0
    %p113 = por %p111, %p112
    %p114 = scmp.ne.s32.totalorder %s100, %s101
    %p115 = scmp.eq.s32.totalorder %s15, 1
    %p116 = por %p114, %p115
    %p118 = scmp.ne.s32.totalorder %s101, %s117
    %p119 = scmp.eq.s32.totalorder %s15, 0
    %p120 = por %p118, %p119
    %p121 = scmp.le.s32.totalorder 1, %s9
    %p122 = scmp.lt.s32.totalorder %s9, 3
    %p123 = pnand %p121, %p122
    %p124 = pneg %p123
    // Predicated region
    $region9: #{tpu_custom_call.1} parent=5 // pred_check
      _
    $region10: #{tpu_custom_call.1} parent=5 // pred_check_branch
      %126 = sbr.rel (%p123) target = $region12
    $region11: #{tpu_custom_call.1} parent=5 // pred_region
      %s127 = ssub.s32 %s9, 1
    $region12: #{tpu_custom_call.1} parent=5 // pred_fallthru
      _
    %p128 = scmp.lt.s32.totalorder %s9, 2
    // Predicated region
    $region13: #{tpu_custom_call.1} parent=5 // pred_check
      %p129 = pneg %p128
    $region14: #{tpu_custom_call.1} parent=5 // pred_check_branch
      %131 = sbr.rel (%p129) target = $region16
    $region15: #{tpu_custom_call.1} parent=5 // pred_region
      // Predicated region
      $region17: #{tpu_custom_call.1} parent=15 // pred_check
        %p132 = pneg %p29
      $region18: #{tpu_custom_call.1} parent=15 // pred_check_branch
        %134 = sbr.rel (%p132) target = $region20
      $region19: #{tpu_custom_call.1} parent=15 // pred_region
        %s135 = smul.u32 87, %s9
        %p136 = scmp.lt.s32.totalorder %s135, 173
        %s137 = scalar_select %p136, %s135, 173
        %s138 = smul.addr %s137, 8
        %s139 = scalar_lea.vmem %s0, %s138
        %s140 = smul.u32 87, %s9
      $region20: #{tpu_custom_call.1} parent=15 // pred_fallthru
        _
      // Predicated region
      $region21: #{tpu_custom_call.1} parent=15 // pred_check
        %p141 = pneg %p55
      $region22: #{tpu_custom_call.1} parent=15 // pred_check_branch
        %143 = sbr.rel (%p141) target = $region24
      $region23: #{tpu_custom_call.1} parent=15 // pred_region
        %s144 = smul.u32 87, %s9
        %p145 = scmp.lt.s32.totalorder %s144, 173
        %s146 = scalar_select %p145, %s144, 173
        %s147 = smul.addr %s146, 8
        %s148 = scalar_lea.vmem %s1, %s147
        %s149 = smul.u32 87, %s9
      $region24: #{tpu_custom_call.1} parent=15 // pred_fallthru
        _
      // Predicated region
      $region25: #{tpu_custom_call.1} parent=15 // pred_check
        %p150 = pneg %p81
      $region26: #{tpu_custom_call.1} parent=15 // pred_check_branch
        %152 = sbr.rel (%p150) target = $region28
      $region27: #{tpu_custom_call.1} parent=15 // pred_region
        %s153 = smul.u32 87, %s9
        %p154 = scmp.lt.s32.totalorder %s153, 173
        %s155 = scalar_select %p154, %s153, 173
        %s156 = smul.addr %s155, 8
        %s157 = scalar_lea.vmem %s2, %s156
        %s158 = smul.u32 87, %s9
      $region28: #{tpu_custom_call.1} parent=15 // pred_fallthru
        _
    $region16: #{tpu_custom_call.1} parent=5 // pred_fallthru
      _
    %p159 = scmp.le.s32.totalorder 1, %s9
    %p160 = scmp.lt.s32.totalorder %s9, 3
    %p161 = pnand %p159, %p160
    %p162 = pneg %p161
    // Predicated region
    $region29: #{tpu_custom_call.1} parent=5 // pred_check
      _
    $region30: #{tpu_custom_call.1} parent=5 // pred_check_branch
      %164 = sbr.rel (%p161) target = $region32
    $region31: #{tpu_custom_call.1} parent=5 // pred_region
      %s165 = ssub.s32 %s9, 1
      %s166 = smul.u32 87, %s14
      %p167 = scmp.lt.s32.totalorder %s166, 173
      %s168 = scalar_select %p167, %s166, 173
      %s169 = smul.addr %s168, 8
      %s170 = scalar_lea.vmem %s0, %s169
      %p171 = pneg %p35
      %p172 = pneg %p32
      %s173 = smul.u32 87, %s14
      %p174 = scmp.lt.s32.totalorder %s173, 173
      %s175 = scalar_select %p174, %s173, 173
      %s176 = smul.addr %s175, 8
      %s177 = scalar_lea.vmem %s1, %s176
      %p178 = pneg %p61
      %p179 = pneg %p58
      %s180 = smul.u32 87, %s14
      %p181 = scmp.lt.s32.totalorder %s180, 173
      %s182 = scalar_select %p181, %s180, 173
      %s183 = smul.addr %s182, 8
      %s184 = scalar_lea.vmem %s2, %s183
      %p185 = pneg %p87
      %p186 = pneg %p84
      %p187 = pneg %p113
      %p188 = pneg %p110
      %s189 = smul.u32 87, %s14
      %p190 = scmp.lt.s32.totalorder %s189, 173
      %s191 = scalar_select %p190, %s189, 173
      %s192 = smul.addr %s191, 8
      %s193 = scalar_lea.vmem %s3, %s192
      %s194 = smul.u32 87, %s14
      %p195 = scmp.lt.s32.totalorder %s194, 173
      %s196 = scalar_select %p195, %s194, 173
      %s197 = smul.addr %s196, 8
      %s198 = scalar_lea.vmem %s0, %s197
      %s199 = smul.u32 87, %s14
      %s200 = smul.u32 87, %s14
      %p201 = scmp.lt.s32.totalorder %s200, 173
      %s202 = scalar_select %p201, %s200, 173
      %s203 = smul.addr %s202, 8
      %s204 = scalar_lea.vmem %s1, %s203
      %s205 = smul.u32 87, %s14
      %s206 = smul.u32 87, %s14
      %p207 = scmp.lt.s32.totalorder %s206, 173
      %s208 = scalar_select %p207, %s206, 173
      %s209 = smul.addr %s208, 8
      %s210 = scalar_lea.vmem %s2, %s209
      %s211 = smul.u32 87, %s14
      %s212 = smul.u32 87, %s14
      %p213 = scmp.lt.s32.totalorder %s212, 173
      %s214 = scalar_select %p213, %s212, 173
      %s215 = smul.addr %s214, 8
      %s216 = scalar_lea.vmem %s3, %s215
      %s217 = smul.u32 87, %s14
      %v218 = vld [vmem:[%s198] sm:$0xff]
      %v219 = vld [vmem:[%s198 + $0x8] sm:$0xff]
      %v220 = vld [vmem:[%s198 + $0x10] sm:$0xff]
      %v221 = vld [vmem:[%s198 + $0x18] sm:$0xff]
      %v222 = vld [vmem:[%s198 + $0x20] sm:$0xff]
      %v223 = vld [vmem:[%s198 + $0x28] sm:$0xff]
      %v224 = vld [vmem:[%s198 + $0x30] sm:$0xff]
      %v225 = vld [vmem:[%s198 + $0x38] sm:$0xff]
      %v226 = vld [vmem:[%s198 + $0x40] sm:$0xff]
      %v227 = vld [vmem:[%s198 + $0x48] sm:$0xff]
      %v228 = vld [vmem:[%s198 + $0x50] sm:$0xff]
      %v229 = vld [vmem:[%s198 + $0x58] sm:$0xff]
      %v230 = vld [vmem:[%s198 + $0x60] sm:$0xff]
      %v231 = vld [vmem:[%s198 + $0x68] sm:$0xff]
      %v232 = vld [vmem:[%s198 + $0x70] sm:$0xff]
      %v233 = vld [vmem:[%s198 + $0x78] sm:$0xff]
      %v234 = vld [vmem:[%s198 + $0x80] sm:$0xff]
      %v235 = vld [vmem:[%s198 + $0x88] sm:$0xff]
      %v236 = vld [vmem:[%s198 + $0x90] sm:$0xff]
      %v237 = vld [vmem:[%s198 + $0x98] sm:$0xff]
      %v238 = vld [vmem:[%s198 + $0xa0] sm:$0xff]
      %v239 = vld [vmem:[%s198 + $0xa8] sm:$0xff]
      %v240 = vld [vmem:[%s198 + $0xb0] sm:$0xff]
      %v241 = vld [vmem:[%s198 + $0xb8] sm:$0xff]
      %v242 = vld [vmem:[%s198 + $0xc0] sm:$0xff]
      %v243 = vld [vmem:[%s198 + $0xc8] sm:$0xff]
      %v244 = vld [vmem:[%s198 + $0xd0] sm:$0xff]
      %v245 = vld [vmem:[%s198 + $0xd8] sm:$0xff]
      %v246 = vld [vmem:[%s198 + $0xe0] sm:$0xff]
      %v247 = vld [vmem:[%s198 + $0xe8] sm:$0xff]
      %v248 = vld [vmem:[%s198 + $0xf0] sm:$0xff]
      %v249 = vld [vmem:[%s198 + $0xf8] sm:$0xff]
      %v250 = vld [vmem:[%s198 + $0x100] sm:$0xff]
      %v251 = vld [vmem:[%s198 + $0x108] sm:$0xff]
      %v252 = vld [vmem:[%s198 + $0x110] sm:$0xff]
      %v253 = vld [vmem:[%s198 + $0x118] sm:$0xff]
      %v254 = vld [vmem:[%s198 + $0x120] sm:$0xff]
      %v255 = vld [vmem:[%s198 + $0x128] sm:$0xff]
      %v256 = vld [vmem:[%s198 + $0x130] sm:$0xff]
      %v257 = vld [vmem:[%s198 + $0x138] sm:$0xff]
      %v258 = vld [vmem:[%s198 + $0x140] sm:$0xff]
      %v259 = vld [vmem:[%s198 + $0x148] sm:$0xff]
      %v260 = vld [vmem:[%s198 + $0x150] sm:$0xff]
      %v261 = vld [vmem:[%s198 + $0x158] sm:$0xff]
      %v262 = vld [vmem:[%s198 + $0x160] sm:$0xff]
      %v263 = vld [vmem:[%s198 + $0x168] sm:$0xff]
      %v264 = vld [vmem:[%s198 + $0x170] sm:$0xff]
      %v265 = vld [vmem:[%s198 + $0x178] sm:$0xff]
      %v266 = vld [vmem:[%s198 + $0x180] sm:$0xff]
      %v267 = vld [vmem:[%s198 + $0x188] sm:$0xff]
      %v268 = vld [vmem:[%s198 + $0x190] sm:$0xff]
      %v269 = vld [vmem:[%s198 + $0x198] sm:$0xff]
      %v270 = vld [vmem:[%s198 + $0x1a0] sm:$0xff]
      %v271 = vld [vmem:[%s198 + $0x1a8] sm:$0xff]
      %v272 = vld [vmem:[%s198 + $0x1b0] sm:$0xff]
      %v273 = vld [vmem:[%s198 + $0x1b8] sm:$0xff]
      %v274 = vld [vmem:[%s198 + $0x1c0] sm:$0xff]
      %v275 = vld [vmem:[%s198 + $0x1c8] sm:$0xff]
      %v276 = vld [vmem:[%s198 + $0x1d0] sm:$0xff]
      %v277 = vld [vmem:[%s198 + $0x1d8] sm:$0xff]
      %v278 = vld [vmem:[%s198 + $0x1e0] sm:$0xff]
      %v279 = vld [vmem:[%s198 + $0x1e8] sm:$0xff]
      %v280 = vld [vmem:[%s198 + $0x1f0] sm:$0xff]
      %v281 = vld [vmem:[%s198 + $0x1f8] sm:$0xff]
      %v282 = vld [vmem:[%s198 + $0x200] sm:$0xff]
      %v283 = vld [vmem:[%s198 + $0x208] sm:$0xff]
      %v284 = vld [vmem:[%s198 + $0x210] sm:$0xff]
      %v285 = vld [vmem:[%s198 + $0x218] sm:$0xff]
      %v286 = vld [vmem:[%s198 + $0x220] sm:$0xff]
      %v287 = vld [vmem:[%s198 + $0x228] sm:$0xff]
      %v288 = vld [vmem:[%s198 + $0x230] sm:$0xff]
      %v289 = vld [vmem:[%s198 + $0x238] sm:$0xff]
      %v290 = vld [vmem:[%s198 + $0x240] sm:$0xff]
      %v291 = vld [vmem:[%s198 + $0x248] sm:$0xff]
      %v292 = vld [vmem:[%s198 + $0x250] sm:$0xff]
      %v293 = vld [vmem:[%s198 + $0x258] sm:$0xff]
      %v294 = vld [vmem:[%s198 + $0x260] sm:$0xff]
      %v295 = vld [vmem:[%s198 + $0x268] sm:$0xff]
      %v296 = vld [vmem:[%s198 + $0x270] sm:$0xff]
      %v297 = vld [vmem:[%s198 + $0x278] sm:$0xff]
      %v298 = vld [vmem:[%s198 + $0x280] sm:$0xff]
      %v299 = vld [vmem:[%s198 + $0x288] sm:$0xff]
      %v300 = vld [vmem:[%s198 + $0x290] sm:$0xff]
      %v301 = vld [vmem:[%s198 + $0x298] sm:$0xff]
      %v302 = vld [vmem:[%s198 + $0x2a0] sm:$0xff]
      %v303 = vld [vmem:[%s198 + $0x2a8] sm:$0xff]
      %v304 = vld [vmem:[%s198 + $0x2b0] sm:$0xff]
      %vm305 = vcmask 400384
      %v306 = vsel %vm305, %v218, 0.0
      %307 = vadd.xlane.f32.xlu0 %v306
      %v308 = vpop.xlane.xlu0 %307
      %v309 = vsel %vm305, %v219, 0.0
      %310 = vadd.xlane.f32.xlu0 %v309
      %v311 = vpop.xlane.xlu0 %310
      %v312 = vsel %vm305, %v220, 0.0
      %313 = vadd.xlane.f32.xlu0 %v312
      %v314 = vpop.xlane.xlu0 %313
      %v315 = vsel %vm305, %v221, 0.0
      %316 = vadd.xlane.f32.xlu0 %v315
      %v317 = vpop.xlane.xlu0 %316
      %v318 = vsel %vm305, %v222, 0.0
      %319 = vadd.xlane.f32.xlu0 %v318
      %v320 = vpop.xlane.xlu0 %319
      %v321 = vsel %vm305, %v223, 0.0
      %322 = vadd.xlane.f32.xlu0 %v321
      %v323 = vpop.xlane.xlu0 %322
      %v324 = vsel %vm305, %v224, 0.0
      %325 = vadd.xlane.f32.xlu0 %v324
      %v326 = vpop.xlane.xlu0 %325
      %v327 = vsel %vm305, %v225, 0.0
      %328 = vadd.xlane.f32.xlu0 %v327
      %v329 = vpop.xlane.xlu0 %328
      %v330 = vsel %vm305, %v226, 0.0
      %331 = vadd.xlane.f32.xlu0 %v330
      %v332 = vpop.xlane.xlu0 %331
      %v333 = vsel %vm305, %v227, 0.0
      %334 = vadd.xlane.f32.xlu0 %v333
      %v335 = vpop.xlane.xlu0 %334
      %v336 = vsel %vm305, %v228, 0.0
      %337 = vadd.xlane.f32.xlu0 %v336
      %v338 = vpop.xlane.xlu0 %337
      %v339 = vsel %vm305, %v229, 0.0
      %340 = vadd.xlane.f32.xlu0 %v339
      %v341 = vpop.xlane.xlu0 %340
      %v342 = vsel %vm305, %v230, 0.0
      %343 = vadd.xlane.f32.xlu0 %v342
      %v344 = vpop.xlane.xlu0 %343
      %v345 = vsel %vm305, %v231, 0.0
      %346 = vadd.xlane.f32.xlu0 %v345
      %v347 = vpop.xlane.xlu0 %346
      %v348 = vsel %vm305, %v232, 0.0
      %349 = vadd.xlane.f32.xlu0 %v348
      %v350 = vpop.xlane.xlu0 %349
      %v351 = vsel %vm305, %v233, 0.0
      %352 = vadd.xlane.f32.xlu0 %v351
      %v353 = vpop.xlane.xlu0 %352
      %v354 = vsel %vm305, %v234, 0.0
      %355 = vadd.xlane.f32.xlu0 %v354
      %v356 = vpop.xlane.xlu0 %355
      %v357 = vsel %vm305, %v235, 0.0
      %358 = vadd.xlane.f32.xlu0 %v357
      %v359 = vpop.xlane.xlu0 %358
      %v360 = vsel %vm305, %v236, 0.0
      %361 = vadd.xlane.f32.xlu0 %v360
      %v362 = vpop.xlane.xlu0 %361
      %v363 = vsel %vm305, %v237, 0.0
      %364 = vadd.xlane.f32.xlu0 %v363
      %v365 = vpop.xlane.xlu0 %364
      %v366 = vsel %vm305, %v238, 0.0
      %367 = vadd.xlane.f32.xlu0 %v366
      %v368 = vpop.xlane.xlu0 %367
      %v369 = vsel %vm305, %v239, 0.0
      %370 = vadd.xlane.f32.xlu0 %v369
      %v371 = vpop.xlane.xlu0 %370
      %v372 = vsel %vm305, %v240, 0.0
      %373 = vadd.xlane.f32.xlu0 %v372
      %v374 = vpop.xlane.xlu0 %373
      %v375 = vsel %vm305, %v241, 0.0
      %376 = vadd.xlane.f32.xlu0 %v375
      %v377 = vpop.xlane.xlu0 %376
      %v378 = vsel %vm305, %v242, 0.0
      %379 = vadd.xlane.f32.xlu0 %v378
      %v380 = vpop.xlane.xlu0 %379
      %v381 = vsel %vm305, %v243, 0.0
      %382 = vadd.xlane.f32.xlu0 %v381
      %v383 = vpop.xlane.xlu0 %382
      %v384 = vsel %vm305, %v244, 0.0
      %385 = vadd.xlane.f32.xlu0 %v384
      %v386 = vpop.xlane.xlu0 %385
      %v387 = vsel %vm305, %v245, 0.0
      %388 = vadd.xlane.f32.xlu0 %v387
      %v389 = vpop.xlane.xlu0 %388
      %v390 = vsel %vm305, %v246, 0.0
      %391 = vadd.xlane.f32.xlu0 %v390
      %v392 = vpop.xlane.xlu0 %391
      %v393 = vsel %vm305, %v247, 0.0
      %394 = vadd.xlane.f32.xlu0 %v393
      %v395 = vpop.xlane.xlu0 %394
      %v396 = vsel %vm305, %v248, 0.0
      %397 = vadd.xlane.f32.xlu0 %v396
      %v398 = vpop.xlane.xlu0 %397
      %v399 = vsel %vm305, %v249, 0.0
      %400 = vadd.xlane.f32.xlu0 %v399
      %v401 = vpop.xlane.xlu0 %400
      %v402 = vsel %vm305, %v250, 0.0
      %403 = vadd.xlane.f32.xlu0 %v402
      %v404 = vpop.xlane.xlu0 %403
      %v405 = vsel %vm305, %v251, 0.0
      %406 = vadd.xlane.f32.xlu0 %v405
      %v407 = vpop.xlane.xlu0 %406
      %v408 = vsel %vm305, %v252, 0.0
      %409 = vadd.xlane.f32.xlu0 %v408
      %v410 = vpop.xlane.xlu0 %409
      %v411 = vsel %vm305, %v253, 0.0
      %412 = vadd.xlane.f32.xlu0 %v411
      %v413 = vpop.xlane.xlu0 %412
      %v414 = vsel %vm305, %v254, 0.0
      %415 = vadd.xlane.f32.xlu0 %v414
      %v416 = vpop.xlane.xlu0 %415
      %v417 = vsel %vm305, %v255, 0.0
      %418 = vadd.xlane.f32.xlu0 %v417
      %v419 = vpop.xlane.xlu0 %418
      %v420 = vsel %vm305, %v256, 0.0
      %421 = vadd.xlane.f32.xlu0 %v420
      %v422 = vpop.xlane.xlu0 %421
      %v423 = vsel %vm305, %v257, 0.0
      %424 = vadd.xlane.f32.xlu0 %v423
      %v425 = vpop.xlane.xlu0 %424
      %v426 = vsel %vm305, %v258, 0.0
      %427 = vadd.xlane.f32.xlu0 %v426
      %v428 = vpop.xlane.xlu0 %427
      %v429 = vsel %vm305, %v259, 0.0
      %430 = vadd.xlane.f32.xlu0 %v429
      %v431 = vpop.xlane.xlu0 %430
      %v432 = vsel %vm305, %v260, 0.0
      %433 = vadd.xlane.f32.xlu0 %v432
      %v434 = vpop.xlane.xlu0 %433
      %v435 = vsel %vm305, %v261, 0.0
      %436 = vadd.xlane.f32.xlu0 %v435
      %v437 = vpop.xlane.xlu0 %436
      %v438 = vsel %vm305, %v262, 0.0
      %439 = vadd.xlane.f32.xlu0 %v438
      %v440 = vpop.xlane.xlu0 %439
      %v441 = vsel %vm305, %v263, 0.0
      %442 = vadd.xlane.f32.xlu0 %v441
      %v443 = vpop.xlane.xlu0 %442
      %v444 = vsel %vm305, %v264, 0.0
      %445 = vadd.xlane.f32.xlu0 %v444
      %v446 = vpop.xlane.xlu0 %445
      %v447 = vsel %vm305, %v265, 0.0
      %448 = vadd.xlane.f32.xlu0 %v447
      %v449 = vpop.xlane.xlu0 %448
      %v450 = vsel %vm305, %v266, 0.0
      %451 = vadd.xlane.f32.xlu0 %v450
      %v452 = vpop.xlane.xlu0 %451
      %v453 = vsel %vm305, %v267, 0.0
      %454 = vadd.xlane.f32.xlu0 %v453
      %v455 = vpop.xlane.xlu0 %454
      %v456 = vsel %vm305, %v268, 0.0
      %457 = vadd.xlane.f32.xlu0 %v456
      %v458 = vpop.xlane.xlu0 %457
      %v459 = vsel %vm305, %v269, 0.0
      %460 = vadd.xlane.f32.xlu0 %v459
      %v461 = vpop.xlane.xlu0 %460
      %v462 = vsel %vm305, %v270, 0.0
      %463 = vadd.xlane.f32.xlu0 %v462
      %v464 = vpop.xlane.xlu0 %463
      %v465 = vsel %vm305, %v271, 0.0
      %466 = vadd.xlane.f32.xlu0 %v465
      %v467 = vpop.xlane.xlu0 %466
      %v468 = vsel %vm305, %v272, 0.0
      %469 = vadd.xlane.f32.xlu0 %v468
      %v470 = vpop.xlane.xlu0 %469
      %v471 = vsel %vm305, %v273, 0.0
      %472 = vadd.xlane.f32.xlu0 %v471
      %v473 = vpop.xlane.xlu0 %472
      %v474 = vsel %vm305, %v274, 0.0
      %475 = vadd.xlane.f32.xlu0 %v474
      %v476 = vpop.xlane.xlu0 %475
      %v477 = vsel %vm305, %v275, 0.0
      %478 = vadd.xlane.f32.xlu0 %v477
      %v479 = vpop.xlane.xlu0 %478
      %v480 = vsel %vm305, %v276, 0.0
      %481 = vadd.xlane.f32.xlu0 %v480
      %v482 = vpop.xlane.xlu0 %481
      %v483 = vsel %vm305, %v277, 0.0
      %484 = vadd.xlane.f32.xlu0 %v483
      %v485 = vpop.xlane.xlu0 %484
      %v486 = vsel %vm305, %v278, 0.0
      %487 = vadd.xlane.f32.xlu0 %v486
      %v488 = vpop.xlane.xlu0 %487
      %v489 = vsel %vm305, %v279, 0.0
      %490 = vadd.xlane.f32.xlu0 %v489
      %v491 = vpop.xlane.xlu0 %490
      %v492 = vsel %vm305, %v280, 0.0
      %493 = vadd.xlane.f32.xlu0 %v492
      %v494 = vpop.xlane.xlu0 %493
      %v495 = vsel %vm305, %v281, 0.0
      %496 = vadd.xlane.f32.xlu0 %v495
      %v497 = vpop.xlane.xlu0 %496
      %v498 = vsel %vm305, %v282, 0.0
      %499 = vadd.xlane.f32.xlu0 %v498
      %v500 = vpop.xlane.xlu0 %499
      %v501 = vsel %vm305, %v283, 0.0
      %502 = vadd.xlane.f32.xlu0 %v501
      %v503 = vpop.xlane.xlu0 %502
      %v504 = vsel %vm305, %v284, 0.0
      %505 = vadd.xlane.f32.xlu0 %v504
      %v506 = vpop.xlane.xlu0 %505
      %v507 = vsel %vm305, %v285, 0.0
      %508 = vadd.xlane.f32.xlu0 %v507
      %v509 = vpop.xlane.xlu0 %508
      %v510 = vsel %vm305, %v286, 0.0
      %511 = vadd.xlane.f32.xlu0 %v510
      %v512 = vpop.xlane.xlu0 %511
      %v513 = vsel %vm305, %v287, 0.0
      %514 = vadd.xlane.f32.xlu0 %v513
      %v515 = vpop.xlane.xlu0 %514
      %v516 = vsel %vm305, %v288, 0.0
      %517 = vadd.xlane.f32.xlu0 %v516
      %v518 = vpop.xlane.xlu0 %517
      %v519 = vsel %vm305, %v289, 0.0
      %520 = vadd.xlane.f32.xlu0 %v519
      %v521 = vpop.xlane.xlu0 %520
      %v522 = vsel %vm305, %v290, 0.0
      %523 = vadd.xlane.f32.xlu0 %v522
      %v524 = vpop.xlane.xlu0 %523
      %v525 = vsel %vm305, %v291, 0.0
      %526 = vadd.xlane.f32.xlu0 %v525
      %v527 = vpop.xlane.xlu0 %526
      %v528 = vsel %vm305, %v292, 0.0
      %529 = vadd.xlane.f32.xlu0 %v528
      %v530 = vpop.xlane.xlu0 %529
      %v531 = vsel %vm305, %v293, 0.0
      %532 = vadd.xlane.f32.xlu0 %v531
      %v533 = vpop.xlane.xlu0 %532
      %v534 = vsel %vm305, %v294, 0.0
      %535 = vadd.xlane.f32.xlu0 %v534
      %v536 = vpop.xlane.xlu0 %535
      %v537 = vsel %vm305, %v295, 0.0
      %538 = vadd.xlane.f32.xlu0 %v537
      %v539 = vpop.xlane.xlu0 %538
      %v540 = vsel %vm305, %v296, 0.0
      %541 = vadd.xlane.f32.xlu0 %v540
      %v542 = vpop.xlane.xlu0 %541
      %v543 = vsel %vm305, %v297, 0.0
      %544 = vadd.xlane.f32.xlu0 %v543
      %v545 = vpop.xlane.xlu0 %544
      %v546 = vsel %vm305, %v298, 0.0
      %547 = vadd.xlane.f32.xlu0 %v546
      %v548 = vpop.xlane.xlu0 %547
      %v549 = vsel %vm305, %v299, 0.0
      %550 = vadd.xlane.f32.xlu0 %v549
      %v551 = vpop.xlane.xlu0 %550
      %v552 = vsel %vm305, %v300, 0.0
      %553 = vadd.xlane.f32.xlu0 %v552
      %v554 = vpop.xlane.xlu0 %553
      %v555 = vsel %vm305, %v301, 0.0
      %556 = vadd.xlane.f32.xlu0 %v555
      %v557 = vpop.xlane.xlu0 %556
      %v558 = vsel %vm305, %v302, 0.0
      %559 = vadd.xlane.f32.xlu0 %v558
      %v560 = vpop.xlane.xlu0 %559
      %v561 = vsel %vm305, %v303, 0.0
      %562 = vadd.xlane.f32.xlu0 %v561
      %v563 = vpop.xlane.xlu0 %562
      %v564 = vsel %vm305, %v304, 0.0
      %565 = vadd.xlane.f32.xlu0 %v564
      %v566 = vpop.xlane.xlu0 %565
      %v567 = vmul.f32 %v308, 0.020408163
      %v568 = vmul.f32 %v311, 0.020408163
      %v569 = vmul.f32 %v314, 0.020408163
      %v570 = vmul.f32 %v317, 0.020408163
      %v571 = vmul.f32 %v320, 0.020408163
      %v572 = vmul.f32 %v323, 0.020408163
      %v573 = vmul.f32 %v326, 0.020408163
      %v574 = vmul.f32 %v329, 0.020408163
      %v575 = vmul.f32 %v332, 0.020408163
      %v576 = vmul.f32 %v335, 0.020408163
      %v577 = vmul.f32 %v338, 0.020408163
      %v578 = vmul.f32 %v341, 0.020408163
      %v579 = vmul.f32 %v344, 0.020408163
      %v580 = vmul.f32 %v347, 0.020408163
      %v581 = vmul.f32 %v350, 0.020408163
      %v582 = vmul.f32 %v353, 0.020408163
      %v583 = vmul.f32 %v356, 0.020408163
      %v584 = vmul.f32 %v359, 0.020408163
      %v585 = vmul.f32 %v362, 0.020408163
      %v586 = vmul.f32 %v365, 0.020408163
      %v587 = vmul.f32 %v368, 0.020408163
      %v588 = vmul.f32 %v371, 0.020408163
      %v589 = vmul.f32 %v374, 0.020408163
      %v590 = vmul.f32 %v377, 0.020408163
      %v591 = vmul.f32 %v380, 0.020408163
      %v592 = vmul.f32 %v383, 0.020408163
      %v593 = vmul.f32 %v386, 0.020408163
      %v594 = vmul.f32 %v389, 0.020408163
      %v595 = vmul.f32 %v392, 0.020408163
      %v596 = vmul.f32 %v395, 0.020408163
      %v597 = vmul.f32 %v398, 0.020408163
      %v598 = vmul.f32 %v401, 0.020408163
      %v599 = vmul.f32 %v404, 0.020408163
      %v600 = vmul.f32 %v407, 0.020408163
      %v601 = vmul.f32 %v410, 0.020408163
      %v602 = vmul.f32 %v413, 0.020408163
      %v603 = vmul.f32 %v416, 0.020408163
      %v604 = vmul.f32 %v419, 0.020408163
      %v605 = vmul.f32 %v422, 0.020408163
      %v606 = vmul.f32 %v425, 0.020408163
      %v607 = vmul.f32 %v428, 0.020408163
      %v608 = vmul.f32 %v431, 0.020408163
      %v609 = vmul.f32 %v434, 0.020408163
      %v610 = vmul.f32 %v437, 0.020408163
      %v611 = vmul.f32 %v440, 0.020408163
      %v612 = vmul.f32 %v443, 0.020408163
      %v613 = vmul.f32 %v446, 0.020408163
      %v614 = vmul.f32 %v449, 0.020408163
      %v615 = vmul.f32 %v452, 0.020408163
      %v616 = vmul.f32 %v455, 0.020408163
      %v617 = vmul.f32 %v458, 0.020408163
      %v618 = vmul.f32 %v461, 0.020408163
      %v619 = vmul.f32 %v464, 0.020408163
      %v620 = vmul.f32 %v467, 0.020408163
      %v621 = vmul.f32 %v470, 0.020408163
      %v622 = vmul.f32 %v473, 0.020408163
      %v623 = vmul.f32 %v476, 0.020408163
      %v624 = vmul.f32 %v479, 0.020408163
      %v625 = vmul.f32 %v482, 0.020408163
      %v626 = vmul.f32 %v485, 0.020408163
      %v627 = vmul.f32 %v488, 0.020408163
      %v628 = vmul.f32 %v491, 0.020408163
      %v629 = vmul.f32 %v494, 0.020408163
      %v630 = vmul.f32 %v497, 0.020408163
      %v631 = vmul.f32 %v500, 0.020408163
      %v632 = vmul.f32 %v503, 0.020408163
      %v633 = vmul.f32 %v506, 0.020408163
      %v634 = vmul.f32 %v509, 0.020408163
      %v635 = vmul.f32 %v512, 0.020408163
      %v636 = vmul.f32 %v515, 0.020408163
      %v637 = vmul.f32 %v518, 0.020408163
      %v638 = vmul.f32 %v521, 0.020408163
      %v639 = vmul.f32 %v524, 0.020408163
      %v640 = vmul.f32 %v527, 0.020408163
      %v641 = vmul.f32 %v530, 0.020408163
      %v642 = vmul.f32 %v533, 0.020408163
      %v643 = vmul.f32 %v536, 0.020408163
      %v644 = vmul.f32 %v539, 0.020408163
      %v645 = vmul.f32 %v542, 0.020408163
      %v646 = vmul.f32 %v545, 0.020408163
      %v647 = vmul.f32 %v548, 0.020408163
      %v648 = vmul.f32 %v551, 0.020408163
      %v649 = vmul.f32 %v554, 0.020408163
      %v650 = vmul.f32 %v557, 0.020408163
      %v651 = vmul.f32 %v560, 0.020408163
      %v652 = vmul.f32 %v563, 0.020408163
      %v653 = vmul.f32 %v566, 0.020408163
      %v654 = vsub.f32 %v218, %v567
      %v655 = vsub.f32 %v219, %v568
      %v656 = vsub.f32 %v220, %v569
      %v657 = vsub.f32 %v221, %v570
      %v658 = vsub.f32 %v222, %v571
      %v659 = vsub.f32 %v223, %v572
      %v660 = vsub.f32 %v224, %v573
      %v661 = vsub.f32 %v225, %v574
      %v662 = vsub.f32 %v226, %v575
      %v663 = vsub.f32 %v227, %v576
      %v664 = vsub.f32 %v228, %v577
      %v665 = vsub.f32 %v229, %v578
      %v666 = vsub.f32 %v230, %v579
      %v667 = vsub.f32 %v231, %v580
      %v668 = vsub.f32 %v232, %v581
      %v669 = vsub.f32 %v233, %v582
      %v670 = vsub.f32 %v234, %v583
      %v671 = vsub.f32 %v235, %v584
      %v672 = vsub.f32 %v236, %v585
      %v673 = vsub.f32 %v237, %v586
      %v674 = vsub.f32 %v238, %v587
      %v675 = vsub.f32 %v239, %v588
      %v676 = vsub.f32 %v240, %v589
      %v677 = vsub.f32 %v241, %v590
      %v678 = vsub.f32 %v242, %v591
      %v679 = vsub.f32 %v243, %v592
      %v680 = vsub.f32 %v244, %v593
      %v681 = vsub.f32 %v245, %v594
      %v682 = vsub.f32 %v246, %v595
      %v683 = vsub.f32 %v247, %v596
      %v684 = vsub.f32 %v248, %v597
      %v685 = vsub.f32 %v249, %v598
      %v686 = vsub.f32 %v250, %v599
      %v687 = vsub.f32 %v251, %v600
      %v688 = vsub.f32 %v252, %v601
      %v689 = vsub.f32 %v253, %v602
      %v690 = vsub.f32 %v254, %v603
      %v691 = vsub.f32 %v255, %v604
      %v692 = vsub.f32 %v256, %v605
      %v693 = vsub.f32 %v257, %v606
      %v694 = vsub.f32 %v258, %v607
      %v695 = vsub.f32 %v259, %v608
      %v696 = vsub.f32 %v260, %v609
      %v697 = vsub.f32 %v261, %v610
      %v698 = vsub.f32 %v262, %v611
      %v699 = vsub.f32 %v263, %v612
      %v700 = vsub.f32 %v264, %v613
      %v701 = vsub.f32 %v265, %v614
      %v702 = vsub.f32 %v266, %v615
      %v703 = vsub.f32 %v267, %v616
      %v704 = vsub.f32 %v268, %v617
      %v705 = vsub.f32 %v269, %v618
      %v706 = vsub.f32 %v270, %v619
      %v707 = vsub.f32 %v271, %v620
      %v708 = vsub.f32 %v272, %v621
      %v709 = vsub.f32 %v273, %v622
      %v710 = vsub.f32 %v274, %v623
      %v711 = vsub.f32 %v275, %v624
      %v712 = vsub.f32 %v276, %v625
      %v713 = vsub.f32 %v277, %v626
      %v714 = vsub.f32 %v278, %v627
      %v715 = vsub.f32 %v279, %v628
      %v716 = vsub.f32 %v280, %v629
      %v717 = vsub.f32 %v281, %v630
      %v718 = vsub.f32 %v282, %v631
      %v719 = vsub.f32 %v283, %v632
      %v720 = vsub.f32 %v284, %v633
      %v721 = vsub.f32 %v285, %v634
      %v722 = vsub.f32 %v286, %v635
      %v723 = vsub.f32 %v287, %v636
      %v724 = vsub.f32 %v288, %v637
      %v725 = vsub.f32 %v289, %v638
      %v726 = vsub.f32 %v290, %v639
      %v727 = vsub.f32 %v291, %v640
      %v728 = vsub.f32 %v292, %v641
      %v729 = vsub.f32 %v293, %v642
      %v730 = vsub.f32 %v294, %v643
      %v731 = vsub.f32 %v295, %v644
      %v732 = vsub.f32 %v296, %v645
      %v733 = vsub.f32 %v297, %v646
      %v734 = vsub.f32 %v298, %v647
      %v735 = vsub.f32 %v299, %v648
      %v736 = vsub.f32 %v300, %v649
      %v737 = vsub.f32 %v301, %v650
      %v738 = vsub.f32 %v302, %v651
      %v739 = vsub.f32 %v303, %v652
      %v740 = vsub.f32 %v304, %v653
      %v741 = vmul.f32 %v654, %v654
      %v742 = vmul.f32 %v655, %v655
      %v743 = vmul.f32 %v656, %v656
      %v744 = vmul.f32 %v657, %v657
      %v745 = vmul.f32 %v658, %v658
      %v746 = vmul.f32 %v659, %v659
      %v747 = vmul.f32 %v660, %v660
      %v748 = vmul.f32 %v661, %v661
      %v749 = vmul.f32 %v662, %v662
      %v750 = vmul.f32 %v663, %v663
      %v751 = vmul.f32 %v664, %v664
      %v752 = vmul.f32 %v665, %v665
      %v753 = vmul.f32 %v666, %v666
      %v754 = vmul.f32 %v667, %v667
      %v755 = vmul.f32 %v668, %v668
      %v756 = vmul.f32 %v669, %v669
      %v757 = vmul.f32 %v670, %v670
      %v758 = vmul.f32 %v671, %v671
      %v759 = vmul.f32 %v672, %v672
      %v760 = vmul.f32 %v673, %v673
      %v761 = vmul.f32 %v674, %v674
      %v762 = vmul.f32 %v675, %v675
      %v763 = vmul.f32 %v676, %v676
      %v764 = vmul.f32 %v677, %v677
      %v765 = vmul.f32 %v678, %v678
      %v766 = vmul.f32 %v679, %v679
      %v767 = vmul.f32 %v680, %v680
      %v768 = vmul.f32 %v681, %v681
      %v769 = vmul.f32 %v682, %v682
      %v770 = vmul.f32 %v683, %v683
      %v771 = vmul.f32 %v684, %v684
      %v772 = vmul.f32 %v685, %v685
      %v773 = vmul.f32 %v686, %v686
      %v774 = vmul.f32 %v687, %v687
      %v775 = vmul.f32 %v688, %v688
      %v776 = vmul.f32 %v689, %v689
      %v777 = vmul.f32 %v690, %v690
      %v778 = vmul.f32 %v691, %v691
      %v779 = vmul.f32 %v692, %v692
      %v780 = vmul.f32 %v693, %v693
      %v781 = vmul.f32 %v694, %v694
      %v782 = vmul.f32 %v695, %v695
      %v783 = vmul.f32 %v696, %v696
      %v784 = vmul.f32 %v697, %v697
      %v785 = vmul.f32 %v698, %v698
      %v786 = vmul.f32 %v699, %v699
      %v787 = vmul.f32 %v700, %v700
      %v788 = vmul.f32 %v701, %v701
      %v789 = vmul.f32 %v702, %v702
      %v790 = vmul.f32 %v703, %v703
      %v791 = vmul.f32 %v704, %v704
      %v792 = vmul.f32 %v705, %v705
      %v793 = vmul.f32 %v706, %v706
      %v794 = vmul.f32 %v707, %v707
      %v795 = vmul.f32 %v708, %v708
      %v796 = vmul.f32 %v709, %v709
      %v797 = vmul.f32 %v710, %v710
      %v798 = vmul.f32 %v711, %v711
      %v799 = vmul.f32 %v712, %v712
      %v800 = vmul.f32 %v713, %v713
      %v801 = vmul.f32 %v714, %v714
      %v802 = vmul.f32 %v715, %v715
      %v803 = vmul.f32 %v716, %v716
      %v804 = vmul.f32 %v717, %v717
      %v805 = vmul.f32 %v718, %v718
      %v806 = vmul.f32 %v719, %v719
      %v807 = vmul.f32 %v720, %v720
      %v808 = vmul.f32 %v721, %v721
      %v809 = vmul.f32 %v722, %v722
      %v810 = vmul.f32 %v723, %v723
      %v811 = vmul.f32 %v724, %v724
      %v812 = vmul.f32 %v725, %v725
      %v813 = vmul.f32 %v726, %v726
      %v814 = vmul.f32 %v727, %v727
      %v815 = vmul.f32 %v728, %v728
      %v816 = vmul.f32 %v729, %v729
      %v817 = vmul.f32 %v730, %v730
      %v818 = vmul.f32 %v731, %v731
      %v819 = vmul.f32 %v732, %v732
      %v820 = vmul.f32 %v733, %v733
      %v821 = vmul.f32 %v734, %v734
      %v822 = vmul.f32 %v735, %v735
      %v823 = vmul.f32 %v736, %v736
      %v824 = vmul.f32 %v737, %v737
      %v825 = vmul.f32 %v738, %v738
      %v826 = vmul.f32 %v739, %v739
      %v827 = vmul.f32 %v740, %v740
      %v828 = vsel %vm305, %v741, 0.0
      %829 = vadd.xlane.f32.xlu0 %v828
      %v830 = vpop.xlane.xlu0 %829
      %v831 = vsel %vm305, %v742, 0.0
      %832 = vadd.xlane.f32.xlu0 %v831
      %v833 = vpop.xlane.xlu0 %832
      %v834 = vsel %vm305, %v743, 0.0
      %835 = vadd.xlane.f32.xlu0 %v834
      %v836 = vpop.xlane.xlu0 %835
      %v837 = vsel %vm305, %v744, 0.0
      %838 = vadd.xlane.f32.xlu0 %v837
      %v839 = vpop.xlane.xlu0 %838
      %v840 = vsel %vm305, %v745, 0.0
      %841 = vadd.xlane.f32.xlu0 %v840
      %v842 = vpop.xlane.xlu0 %841
      %v843 = vsel %vm305, %v746, 0.0
      %844 = vadd.xlane.f32.xlu0 %v843
      %v845 = vpop.xlane.xlu0 %844
      %v846 = vsel %vm305, %v747, 0.0
      %847 = vadd.xlane.f32.xlu0 %v846
      %v848 = vpop.xlane.xlu0 %847
      %v849 = vsel %vm305, %v748, 0.0
      %850 = vadd.xlane.f32.xlu0 %v849
      %v851 = vpop.xlane.xlu0 %850
      %v852 = vsel %vm305, %v749, 0.0
      %853 = vadd.xlane.f32.xlu0 %v852
      %v854 = vpop.xlane.xlu0 %853
      %v855 = vsel %vm305, %v750, 0.0
      %856 = vadd.xlane.f32.xlu0 %v855
      %v857 = vpop.xlane.xlu0 %856
      %v858 = vsel %vm305, %v751, 0.0
      %859 = vadd.xlane.f32.xlu0 %v858
      %v860 = vpop.xlane.xlu0 %859
      %v861 = vsel %vm305, %v752, 0.0
      %862 = vadd.xlane.f32.xlu0 %v861
      %v863 = vpop.xlane.xlu0 %862
      %v864 = vsel %vm305, %v753, 0.0
      %865 = vadd.xlane.f32.xlu0 %v864
      %v866 = vpop.xlane.xlu0 %865
      %v867 = vsel %vm305, %v754, 0.0
      %868 = vadd.xlane.f32.xlu0 %v867
      %v869 = vpop.xlane.xlu0 %868
      %v870 = vsel %vm305, %v755, 0.0
      %871 = vadd.xlane.f32.xlu0 %v870
      %v872 = vpop.xlane.xlu0 %871
      %v873 = vsel %vm305, %v756, 0.0
      %874 = vadd.xlane.f32.xlu0 %v873
      %v875 = vpop.xlane.xlu0 %874
      %v876 = vsel %vm305, %v757, 0.0
      %877 = vadd.xlane.f32.xlu0 %v876
      %v878 = vpop.xlane.xlu0 %877
      %v879 = vsel %vm305, %v758, 0.0
      %880 = vadd.xlane.f32.xlu0 %v879
      %v881 = vpop.xlane.xlu0 %880
      %v882 = vsel %vm305, %v759, 0.0
      %883 = vadd.xlane.f32.xlu0 %v882
      %v884 = vpop.xlane.xlu0 %883
      %v885 = vsel %vm305, %v760, 0.0
      %886 = vadd.xlane.f32.xlu0 %v885
      %v887 = vpop.xlane.xlu0 %886
      %v888 = vsel %vm305, %v761, 0.0
      %889 = vadd.xlane.f32.xlu0 %v888
      %v890 = vpop.xlane.xlu0 %889
      %v891 = vsel %vm305, %v762, 0.0
      %892 = vadd.xlane.f32.xlu0 %v891
      %v893 = vpop.xlane.xlu0 %892
      %v894 = vsel %vm305, %v763, 0.0
      %895 = vadd.xlane.f32.xlu0 %v894
      %v896 = vpop.xlane.xlu0 %895
      %v897 = vsel %vm305, %v764, 0.0
      %898 = vadd.xlane.f32.xlu0 %v897
      %v899 = vpop.xlane.xlu0 %898
      %v900 = vsel %vm305, %v765, 0.0
      %901 = vadd.xlane.f32.xlu0 %v900
      %v902 = vpop.xlane.xlu0 %901
      %v903 = vsel %vm305, %v766, 0.0
      %904 = vadd.xlane.f32.xlu0 %v903
      %v905 = vpop.xlane.xlu0 %904
      %v906 = vsel %vm305, %v767, 0.0
      %907 = vadd.xlane.f32.xlu0 %v906
      %v908 = vpop.xlane.xlu0 %907
      %v909 = vsel %vm305, %v768, 0.0
      %910 = vadd.xlane.f32.xlu0 %v909
      %v911 = vpop.xlane.xlu0 %910
      %v912 = vsel %vm305, %v769, 0.0
      %913 = vadd.xlane.f32.xlu0 %v912
      %v914 = vpop.xlane.xlu0 %913
      %v915 = vsel %vm305, %v770, 0.0
      %916 = vadd.xlane.f32.xlu0 %v915
      %v917 = vpop.xlane.xlu0 %916
      %v918 = vsel %vm305, %v771, 0.0
      %919 = vadd.xlane.f32.xlu0 %v918
      %v920 = vpop.xlane.xlu0 %919
      %v921 = vsel %vm305, %v772, 0.0
      %922 = vadd.xlane.f32.xlu0 %v921
      %v923 = vpop.xlane.xlu0 %922
      %v924 = vsel %vm305, %v773, 0.0
      %925 = vadd.xlane.f32.xlu0 %v924
      %v926 = vpop.xlane.xlu0 %925
      %v927 = vsel %vm305, %v774, 0.0
      %928 = vadd.xlane.f32.xlu0 %v927
      %v929 = vpop.xlane.xlu0 %928
      %v930 = vsel %vm305, %v775, 0.0
      %931 = vadd.xlane.f32.xlu0 %v930
      %v932 = vpop.xlane.xlu0 %931
      %v933 = vsel %vm305, %v776, 0.0
      %934 = vadd.xlane.f32.xlu0 %v933
      %v935 = vpop.xlane.xlu0 %934
      %v936 = vsel %vm305, %v777, 0.0
      %937 = vadd.xlane.f32.xlu0 %v936
      %v938 = vpop.xlane.xlu0 %937
      %v939 = vsel %vm305, %v778, 0.0
      %940 = vadd.xlane.f32.xlu0 %v939
      %v941 = vpop.xlane.xlu0 %940
      %v942 = vsel %vm305, %v779, 0.0
      %943 = vadd.xlane.f32.xlu0 %v942
      %v944 = vpop.xlane.xlu0 %943
      %v945 = vsel %vm305, %v780, 0.0
      %946 = vadd.xlane.f32.xlu0 %v945
      %v947 = vpop.xlane.xlu0 %946
      %v948 = vsel %vm305, %v781, 0.0
      %949 = vadd.xlane.f32.xlu0 %v948
      %v950 = vpop.xlane.xlu0 %949
      %v951 = vsel %vm305, %v782, 0.0
      %952 = vadd.xlane.f32.xlu0 %v951
      %v953 = vpop.xlane.xlu0 %952
      %v954 = vsel %vm305, %v783, 0.0
      %955 = vadd.xlane.f32.xlu0 %v954
      %v956 = vpop.xlane.xlu0 %955
      %v957 = vsel %vm305, %v784, 0.0
      %958 = vadd.xlane.f32.xlu0 %v957
      %v959 = vpop.xlane.xlu0 %958
      %v960 = vsel %vm305, %v785, 0.0
      %961 = vadd.xlane.f32.xlu0 %v960
      %v962 = vpop.xlane.xlu0 %961
      %v963 = vsel %vm305, %v786, 0.0
      %964 = vadd.xlane.f32.xlu0 %v963
      %v965 = vpop.xlane.xlu0 %964
      %v966 = vsel %vm305, %v787, 0.0
      %967 = vadd.xlane.f32.xlu0 %v966
      %v968 = vpop.xlane.xlu0 %967
      %v969 = vsel %vm305, %v788, 0.0
      %970 = vadd.xlane.f32.xlu0 %v969
      %v971 = vpop.xlane.xlu0 %970
      %v972 = vsel %vm305, %v789, 0.0
      %973 = vadd.xlane.f32.xlu0 %v972
      %v974 = vpop.xlane.xlu0 %973
      %v975 = vsel %vm305, %v790, 0.0
      %976 = vadd.xlane.f32.xlu0 %v975
      %v977 = vpop.xlane.xlu0 %976
      %v978 = vsel %vm305, %v791, 0.0
      %979 = vadd.xlane.f32.xlu0 %v978
      %v980 = vpop.xlane.xlu0 %979
      %v981 = vsel %vm305, %v792, 0.0
      %982 = vadd.xlane.f32.xlu0 %v981
      %v983 = vpop.xlane.xlu0 %982
      %v984 = vsel %vm305, %v793, 0.0
      %985 = vadd.xlane.f32.xlu0 %v984
      %v986 = vpop.xlane.xlu0 %985
      %v987 = vsel %vm305, %v794, 0.0
      %988 = vadd.xlane.f32.xlu0 %v987
      %v989 = vpop.xlane.xlu0 %988
      %v990 = vsel %vm305, %v795, 0.0
      %991 = vadd.xlane.f32.xlu0 %v990
      %v992 = vpop.xlane.xlu0 %991
      %v993 = vsel %vm305, %v796, 0.0
      %994 = vadd.xlane.f32.xlu0 %v993
      %v995 = vpop.xlane.xlu0 %994
      %v996 = vsel %vm305, %v797, 0.0
      %997 = vadd.xlane.f32.xlu0 %v996
      %v998 = vpop.xlane.xlu0 %997
      %v999 = vsel %vm305, %v798, 0.0
      %1000 = vadd.xlane.f32.xlu0 %v999
      %v1001 = vpop.xlane.xlu0 %1000
      %v1002 = vsel %vm305, %v799, 0.0
      %1003 = vadd.xlane.f32.xlu0 %v1002
      %v1004 = vpop.xlane.xlu0 %1003
      %v1005 = vsel %vm305, %v800, 0.0
      %1006 = vadd.xlane.f32.xlu0 %v1005
      %v1007 = vpop.xlane.xlu0 %1006
      %v1008 = vsel %vm305, %v801, 0.0
      %1009 = vadd.xlane.f32.xlu0 %v1008
      %v1010 = vpop.xlane.xlu0 %1009
      %v1011 = vsel %vm305, %v802, 0.0
      %1012 = vadd.xlane.f32.xlu0 %v1011
      %v1013 = vpop.xlane.xlu0 %1012
      %v1014 = vsel %vm305, %v803, 0.0
      %1015 = vadd.xlane.f32.xlu0 %v1014
      %v1016 = vpop.xlane.xlu0 %1015
      %v1017 = vsel %vm305, %v804, 0.0
      %1018 = vadd.xlane.f32.xlu0 %v1017
      %v1019 = vpop.xlane.xlu0 %1018
      %v1020 = vsel %vm305, %v805, 0.0
      %1021 = vadd.xlane.f32.xlu0 %v1020
      %v1022 = vpop.xlane.xlu0 %1021
      %v1023 = vsel %vm305, %v806, 0.0
      %1024 = vadd.xlane.f32.xlu0 %v1023
      %v1025 = vpop.xlane.xlu0 %1024
      %v1026 = vsel %vm305, %v807, 0.0
      %1027 = vadd.xlane.f32.xlu0 %v1026
      %v1028 = vpop.xlane.xlu0 %1027
      %v1029 = vsel %vm305, %v808, 0.0
      %1030 = vadd.xlane.f32.xlu0 %v1029
      %v1031 = vpop.xlane.xlu0 %1030
      %v1032 = vsel %vm305, %v809, 0.0
      %1033 = vadd.xlane.f32.xlu0 %v1032
      %v1034 = vpop.xlane.xlu0 %1033
      %v1035 = vsel %vm305, %v810, 0.0
      %1036 = vadd.xlane.f32.xlu0 %v1035
      %v1037 = vpop.xlane.xlu0 %1036
      %v1038 = vsel %vm305, %v811, 0.0
      %1039 = vadd.xlane.f32.xlu0 %v1038
      %v1040 = vpop.xlane.xlu0 %1039
      %v1041 = vsel %vm305, %v812, 0.0
      %1042 = vadd.xlane.f32.xlu0 %v1041
      %v1043 = vpop.xlane.xlu0 %1042
      %v1044 = vsel %vm305, %v813, 0.0
      %1045 = vadd.xlane.f32.xlu0 %v1044
      %v1046 = vpop.xlane.xlu0 %1045
      %v1047 = vsel %vm305, %v814, 0.0
      %1048 = vadd.xlane.f32.xlu0 %v1047
      %v1049 = vpop.xlane.xlu0 %1048
      %v1050 = vsel %vm305, %v815, 0.0
      %1051 = vadd.xlane.f32.xlu0 %v1050
      %v1052 = vpop.xlane.xlu0 %1051
      %v1053 = vsel %vm305, %v816, 0.0
      %1054 = vadd.xlane.f32.xlu0 %v1053
      %v1055 = vpop.xlane.xlu0 %1054
      %v1056 = vsel %vm305, %v817, 0.0
      %1057 = vadd.xlane.f32.xlu0 %v1056
      %v1058 = vpop.xlane.xlu0 %1057
      %v1059 = vsel %vm305, %v818, 0.0
      %1060 = vadd.xlane.f32.xlu0 %v1059
      %v1061 = vpop.xlane.xlu0 %1060
      %v1062 = vsel %vm305, %v819, 0.0
      %1063 = vadd.xlane.f32.xlu0 %v1062
      %v1064 = vpop.xlane.xlu0 %1063
      %v1065 = vsel %vm305, %v820, 0.0
      %1066 = vadd.xlane.f32.xlu0 %v1065
      %v1067 = vpop.xlane.xlu0 %1066
      %v1068 = vsel %vm305, %v821, 0.0
      %1069 = vadd.xlane.f32.xlu0 %v1068
      %v1070 = vpop.xlane.xlu0 %1069
      %v1071 = vsel %vm305, %v822, 0.0
      %1072 = vadd.xlane.f32.xlu0 %v1071
      %v1073 = vpop.xlane.xlu0 %1072
      %v1074 = vsel %vm305, %v823, 0.0
      %1075 = vadd.xlane.f32.xlu0 %v1074
      %v1076 = vpop.xlane.xlu0 %1075
      %v1077 = vsel %vm305, %v824, 0.0
      %1078 = vadd.xlane.f32.xlu0 %v1077
      %v1079 = vpop.xlane.xlu0 %1078
      %v1080 = vsel %vm305, %v825, 0.0
      %1081 = vadd.xlane.f32.xlu0 %v1080
      %v1082 = vpop.xlane.xlu0 %1081
      %v1083 = vsel %vm305, %v826, 0.0
      %1084 = vadd.xlane.f32.xlu0 %v1083
      %v1085 = vpop.xlane.xlu0 %1084
      %v1086 = vsel %vm305, %v827, 0.0
      %1087 = vadd.xlane.f32.xlu0 %v1086
      %v1088 = vpop.xlane.xlu0 %1087
      %v1089 = vmul.f32 %v830, 0.020408163
      %v1090 = vmul.f32 %v833, 0.020408163
      %v1091 = vmul.f32 %v836, 0.020408163
      %v1092 = vmul.f32 %v839, 0.020408163
      %v1093 = vmul.f32 %v842, 0.020408163
      %v1094 = vmul.f32 %v845, 0.020408163
      %v1095 = vmul.f32 %v848, 0.020408163
      %v1096 = vmul.f32 %v851, 0.020408163
      %v1097 = vmul.f32 %v854, 0.020408163
      %v1098 = vmul.f32 %v857, 0.020408163
      %v1099 = vmul.f32 %v860, 0.020408163
      %v1100 = vmul.f32 %v863, 0.020408163
      %v1101 = vmul.f32 %v866, 0.020408163
      %v1102 = vmul.f32 %v869, 0.020408163
      %v1103 = vmul.f32 %v872, 0.020408163
      %v1104 = vmul.f32 %v875, 0.020408163
      %v1105 = vmul.f32 %v878, 0.020408163
      %v1106 = vmul.f32 %v881, 0.020408163
      %v1107 = vmul.f32 %v884, 0.020408163
      %v1108 = vmul.f32 %v887, 0.020408163
      %v1109 = vmul.f32 %v890, 0.020408163
      %v1110 = vmul.f32 %v893, 0.020408163
      %v1111 = vmul.f32 %v896, 0.020408163
      %v1112 = vmul.f32 %v899, 0.020408163
      %v1113 = vmul.f32 %v902, 0.020408163
      %v1114 = vmul.f32 %v905, 0.020408163
      %v1115 = vmul.f32 %v908, 0.020408163
      %v1116 = vmul.f32 %v911, 0.020408163
      %v1117 = vmul.f32 %v914, 0.020408163
      %v1118 = vmul.f32 %v917, 0.020408163
      %v1119 = vmul.f32 %v920, 0.020408163
      %v1120 = vmul.f32 %v923, 0.020408163
      %v1121 = vmul.f32 %v926, 0.020408163
      %v1122 = vmul.f32 %v929, 0.020408163
      %v1123 = vmul.f32 %v932, 0.020408163
      %v1124 = vmul.f32 %v935, 0.020408163
      %v1125 = vmul.f32 %v938, 0.020408163
      %v1126 = vmul.f32 %v941, 0.020408163
      %v1127 = vmul.f32 %v944, 0.020408163
      %v1128 = vmul.f32 %v947, 0.020408163
      %v1129 = vmul.f32 %v950, 0.020408163
      %v1130 = vmul.f32 %v953, 0.020408163
      %v1131 = vmul.f32 %v956, 0.020408163
      %v1132 = vmul.f32 %v959, 0.020408163
      %v1133 = vmul.f32 %v962, 0.020408163
      %v1134 = vmul.f32 %v965, 0.020408163
      %v1135 = vmul.f32 %v968, 0.020408163
      %v1136 = vmul.f32 %v971, 0.020408163
      %v1137 = vmul.f32 %v974, 0.020408163
      %v1138 = vmul.f32 %v977, 0.020408163
      %v1139 = vmul.f32 %v980, 0.020408163
      %v1140 = vmul.f32 %v983, 0.020408163
      %v1141 = vmul.f32 %v986, 0.020408163
      %v1142 = vmul.f32 %v989, 0.020408163
      %v1143 = vmul.f32 %v992, 0.020408163
      %v1144 = vmul.f32 %v995, 0.020408163
      %v1145 = vmul.f32 %v998, 0.020408163
      %v1146 = vmul.f32 %v1001, 0.020408163
      %v1147 = vmul.f32 %v1004, 0.020408163
      %v1148 = vmul.f32 %v1007, 0.020408163
      %v1149 = vmul.f32 %v1010, 0.020408163
      %v1150 = vmul.f32 %v1013, 0.020408163
      %v1151 = vmul.f32 %v1016, 0.020408163
      %v1152 = vmul.f32 %v1019, 0.020408163
      %v1153 = vmul.f32 %v1022, 0.020408163
      %v1154 = vmul.f32 %v1025, 0.020408163
      %v1155 = vmul.f32 %v1028, 0.020408163
      %v1156 = vmul.f32 %v1031, 0.020408163
      %v1157 = vmul.f32 %v1034, 0.020408163
      %v1158 = vmul.f32 %v1037, 0.020408163
      %v1159 = vmul.f32 %v1040, 0.020408163
      %v1160 = vmul.f32 %v1043, 0.020408163
      %v1161 = vmul.f32 %v1046, 0.020408163
      %v1162 = vmul.f32 %v1049, 0.020408163
      %v1163 = vmul.f32 %v1052, 0.020408163
      %v1164 = vmul.f32 %v1055, 0.020408163
      %v1165 = vmul.f32 %v1058, 0.020408163
      %v1166 = vmul.f32 %v1061, 0.020408163
      %v1167 = vmul.f32 %v1064, 0.020408163
      %v1168 = vmul.f32 %v1067, 0.020408163
      %v1169 = vmul.f32 %v1070, 0.020408163
      %v1170 = vmul.f32 %v1073, 0.020408163
      %v1171 = vmul.f32 %v1076, 0.020408163
      %v1172 = vmul.f32 %v1079, 0.020408163
      %v1173 = vmul.f32 %v1082, 0.020408163
      %v1174 = vmul.f32 %v1085, 0.020408163
      %v1175 = vmul.f32 %v1088, 0.020408163
      %v1176 = vadd.f32 %v1089, 1e-05
      %v1177 = vadd.f32 %v1090, 1e-05
      %v1178 = vadd.f32 %v1091, 1e-05
      %v1179 = vadd.f32 %v1092, 1e-05
      %v1180 = vadd.f32 %v1093, 1e-05
      %v1181 = vadd.f32 %v1094, 1e-05
      %v1182 = vadd.f32 %v1095, 1e-05
      %v1183 = vadd.f32 %v1096, 1e-05
      %v1184 = vadd.f32 %v1097, 1e-05
      %v1185 = vadd.f32 %v1098, 1e-05
      %v1186 = vadd.f32 %v1099, 1e-05
      %v1187 = vadd.f32 %v1100, 1e-05
      %v1188 = vadd.f32 %v1101, 1e-05
      %v1189 = vadd.f32 %v1102, 1e-05
      %v1190 = vadd.f32 %v1103, 1e-05
      %v1191 = vadd.f32 %v1104, 1e-05
      %v1192 = vadd.f32 %v1105, 1e-05
      %v1193 = vadd.f32 %v1106, 1e-05
      %v1194 = vadd.f32 %v1107, 1e-05
      %v1195 = vadd.f32 %v1108, 1e-05
      %v1196 = vadd.f32 %v1109, 1e-05
      %v1197 = vadd.f32 %v1110, 1e-05
      %v1198 = vadd.f32 %v1111, 1e-05
      %v1199 = vadd.f32 %v1112, 1e-05
      %v1200 = vadd.f32 %v1113, 1e-05
      %v1201 = vadd.f32 %v1114, 1e-05
      %v1202 = vadd.f32 %v1115, 1e-05
      %v1203 = vadd.f32 %v1116, 1e-05
      %v1204 = vadd.f32 %v1117, 1e-05
      %v1205 = vadd.f32 %v1118, 1e-05
      %v1206 = vadd.f32 %v1119, 1e-05
      %v1207 = vadd.f32 %v1120, 1e-05
      %v1208 = vadd.f32 %v1121, 1e-05
      %v1209 = vadd.f32 %v1122, 1e-05
      %v1210 = vadd.f32 %v1123, 1e-05
      %v1211 = vadd.f32 %v1124, 1e-05
      %v1212 = vadd.f32 %v1125, 1e-05
      %v1213 = vadd.f32 %v1126, 1e-05
      %v1214 = vadd.f32 %v1127, 1e-05
      %v1215 = vadd.f32 %v1128, 1e-05
      %v1216 = vadd.f32 %v1129, 1e-05
      %v1217 = vadd.f32 %v1130, 1e-05
      %v1218 = vadd.f32 %v1131, 1e-05
      %v1219 = vadd.f32 %v1132, 1e-05
      %v1220 = vadd.f32 %v1133, 1e-05
      %v1221 = vadd.f32 %v1134, 1e-05
      %v1222 = vadd.f32 %v1135, 1e-05
      %v1223 = vadd.f32 %v1136, 1e-05
      %v1224 = vadd.f32 %v1137, 1e-05
      %v1225 = vadd.f32 %v1138, 1e-05
      %v1226 = vadd.f32 %v1139, 1e-05
      %v1227 = vadd.f32 %v1140, 1e-05
      %v1228 = vadd.f32 %v1141, 1e-05
      %v1229 = vadd.f32 %v1142, 1e-05
      %v1230 = vadd.f32 %v1143, 1e-05
      %v1231 = vadd.f32 %v1144, 1e-05
      %v1232 = vadd.f32 %v1145, 1e-05
      %v1233 = vadd.f32 %v1146, 1e-05
      %v1234 = vadd.f32 %v1147, 1e-05
      %v1235 = vadd.f32 %v1148, 1e-05
      %v1236 = vadd.f32 %v1149, 1e-05
      %v1237 = vadd.f32 %v1150, 1e-05
      %v1238 = vadd.f32 %v1151, 1e-05
      %v1239 = vadd.f32 %v1152, 1e-05
      %v1240 = vadd.f32 %v1153, 1e-05
      %v1241 = vadd.f32 %v1154, 1e-05
      %v1242 = vadd.f32 %v1155, 1e-05
      %v1243 = vadd.f32 %v1156, 1e-05
      %v1244 = vadd.f32 %v1157, 1e-05
      %v1245 = vadd.f32 %v1158, 1e-05
      %v1246 = vadd.f32 %v1159, 1e-05
      %v1247 = vadd.f32 %v1160, 1e-05
      %v1248 = vadd.f32 %v1161, 1e-05
      %v1249 = vadd.f32 %v1162, 1e-05
      %v1250 = vadd.f32 %v1163, 1e-05
      %v1251 = vadd.f32 %v1164, 1e-05
      %v1252 = vadd.f32 %v1165, 1e-05
      %v1253 = vadd.f32 %v1166, 1e-05
      %v1254 = vadd.f32 %v1167, 1e-05
      %v1255 = vadd.f32 %v1168, 1e-05
      %v1256 = vadd.f32 %v1169, 1e-05
      %v1257 = vadd.f32 %v1170, 1e-05
      %v1258 = vadd.f32 %v1171, 1e-05
      %v1259 = vadd.f32 %v1172, 1e-05
      %v1260 = vadd.f32 %v1173, 1e-05
      %v1261 = vadd.f32 %v1174, 1e-05
      %v1262 = vadd.f32 %v1175, 1e-05
      %v1263 = vrsqrt.pop %v1176
      %v1264 = vrsqrt.pop %v1177
      %v1265 = vrsqrt.pop %v1178
      %v1266 = vrsqrt.pop %v1179
      %v1267 = vrsqrt.pop %v1180
      %v1268 = vrsqrt.pop %v1181
      %v1269 = vrsqrt.pop %v1182
      %v1270 = vrsqrt.pop %v1183
      %v1271 = vrsqrt.pop %v1184
      %v1272 = vrsqrt.pop %v1185
      %v1273 = vrsqrt.pop %v1186
      %v1274 = vrsqrt.pop %v1187
      %v1275 = vrsqrt.pop %v1188
      %v1276 = vrsqrt.pop %v1189
      %v1277 = vrsqrt.pop %v1190
      %v1278 = vrsqrt.pop %v1191
      %v1279 = vrsqrt.pop %v1192
      %v1280 = vrsqrt.pop %v1193
      %v1281 = vrsqrt.pop %v1194
      %v1282 = vrsqrt.pop %v1195
      %v1283 = vrsqrt.pop %v1196
      %v1284 = vrsqrt.pop %v1197
      %v1285 = vrsqrt.pop %v1198
      %v1286 = vrsqrt.pop %v1199
      %v1287 = vrsqrt.pop %v1200
      %v1288 = vrsqrt.pop %v1201
      %v1289 = vrsqrt.pop %v1202
      %v1290 = vrsqrt.pop %v1203
      %v1291 = vrsqrt.pop %v1204
      %v1292 = vrsqrt.pop %v1205
      %v1293 = vrsqrt.pop %v1206
      %v1294 = vrsqrt.pop %v1207
      %v1295 = vrsqrt.pop %v1208
      %v1296 = vrsqrt.pop %v1209
      %v1297 = vrsqrt.pop %v1210
      %v1298 = vrsqrt.pop %v1211
      %v1299 = vrsqrt.pop %v1212
      %v1300 = vrsqrt.pop %v1213
      %v1301 = vrsqrt.pop %v1214
      %v1302 = vrsqrt.pop %v1215
      %v1303 = vrsqrt.pop %v1216
      %v1304 = vrsqrt.pop %v1217
      %v1305 = vrsqrt.pop %v1218
      %v1306 = vrsqrt.pop %v1219
      %v1307 = vrsqrt.pop %v1220
      %v1308 = vrsqrt.pop %v1221
      %v1309 = vrsqrt.pop %v1222
      %v1310 = vrsqrt.pop %v1223
      %v1311 = vrsqrt.pop %v1224
      %v1312 = vrsqrt.pop %v1225
      %v1313 = vrsqrt.pop %v1226
      %v1314 = vrsqrt.pop %v1227
      %v1315 = vrsqrt.pop %v1228
      %v1316 = vrsqrt.pop %v1229
      %v1317 = vrsqrt.pop %v1230
      %v1318 = vrsqrt.pop %v1231
      %v1319 = vrsqrt.pop %v1232
      %v1320 = vrsqrt.pop %v1233
      %v1321 = vrsqrt.pop %v1234
      %v1322 = vrsqrt.pop %v1235
      %v1323 = vrsqrt.pop %v1236
      %v1324 = vrsqrt.pop %v1237
      %v1325 = vrsqrt.pop %v1238
      %v1326 = vrsqrt.pop %v1239
      %v1327 = vrsqrt.pop %v1240
      %v1328 = vrsqrt.pop %v1241
      %v1329 = vrsqrt.pop %v1242
      %v1330 = vrsqrt.pop %v1243
      %v1331 = vrsqrt.pop %v1244
      %v1332 = vrsqrt.pop %v1245
      %v1333 = vrsqrt.pop %v1246
      %v1334 = vrsqrt.pop %v1247
      %v1335 = vrsqrt.pop %v1248
      %v1336 = vrsqrt.pop %v1249
      %v1337 = vrsqrt.pop %v1250
      %v1338 = vrsqrt.pop %v1251
      %v1339 = vrsqrt.pop %v1252
      %v1340 = vrsqrt.pop %v1253
      %v1341 = vrsqrt.pop %v1254
      %v1342 = vrsqrt.pop %v1255
      %v1343 = vrsqrt.pop %v1256
      %v1344 = vrsqrt.pop %v1257
      %v1345 = vrsqrt.pop %v1258
      %v1346 = vrsqrt.pop %v1259
      %v1347 = vrsqrt.pop %v1260
      %v1348 = vrsqrt.pop %v1261
      %v1349 = vrsqrt.pop %v1262
      %v1350 = vld [vmem:[%s204] sm:$0xff]
      %v1351 = vld [vmem:[%s204 + $0x8] sm:$0xff]
      %v1352 = vld [vmem:[%s204 + $0x10] sm:$0xff]
      %v1353 = vld [vmem:[%s204 + $0x18] sm:$0xff]
      %v1354 = vld [vmem:[%s204 + $0x20] sm:$0xff]
      %v1355 = vld [vmem:[%s204 + $0x28] sm:$0xff]
      %v1356 = vld [vmem:[%s204 + $0x30] sm:$0xff]
      %v1357 = vld [vmem:[%s204 + $0x38] sm:$0xff]
      %v1358 = vld [vmem:[%s204 + $0x40] sm:$0xff]
      %v1359 = vld [vmem:[%s204 + $0x48] sm:$0xff]
      %v1360 = vld [vmem:[%s204 + $0x50] sm:$0xff]
      %v1361 = vld [vmem:[%s204 + $0x58] sm:$0xff]
      %v1362 = vld [vmem:[%s204 + $0x60] sm:$0xff]
      %v1363 = vld [vmem:[%s204 + $0x68] sm:$0xff]
      %v1364 = vld [vmem:[%s204 + $0x70] sm:$0xff]
      %v1365 = vld [vmem:[%s204 + $0x78] sm:$0xff]
      %v1366 = vld [vmem:[%s204 + $0x80] sm:$0xff]
      %v1367 = vld [vmem:[%s204 + $0x88] sm:$0xff]
      %v1368 = vld [vmem:[%s204 + $0x90] sm:$0xff]
      %v1369 = vld [vmem:[%s204 + $0x98] sm:$0xff]
      %v1370 = vld [vmem:[%s204 + $0xa0] sm:$0xff]
      %v1371 = vld [vmem:[%s204 + $0xa8] sm:$0xff]
      %v1372 = vld [vmem:[%s204 + $0xb0] sm:$0xff]
      %v1373 = vld [vmem:[%s204 + $0xb8] sm:$0xff]
      %v1374 = vld [vmem:[%s204 + $0xc0] sm:$0xff]
      %v1375 = vld [vmem:[%s204 + $0xc8] sm:$0xff]
      %v1376 = vld [vmem:[%s204 + $0xd0] sm:$0xff]
      %v1377 = vld [vmem:[%s204 + $0xd8] sm:$0xff]
      %v1378 = vld [vmem:[%s204 + $0xe0] sm:$0xff]
      %v1379 = vld [vmem:[%s204 + $0xe8] sm:$0xff]
      %v1380 = vld [vmem:[%s204 + $0xf0] sm:$0xff]
      %v1381 = vld [vmem:[%s204 + $0xf8] sm:$0xff]
      %v1382 = vld [vmem:[%s204 + $0x100] sm:$0xff]
      %v1383 = vld [vmem:[%s204 + $0x108] sm:$0xff]
      %v1384 = vld [vmem:[%s204 + $0x110] sm:$0xff]
      %v1385 = vld [vmem:[%s204 + $0x118] sm:$0xff]
      %v1386 = vld [vmem:[%s204 + $0x120] sm:$0xff]
      %v1387 = vld [vmem:[%s204 + $0x128] sm:$0xff]
      %v1388 = vld [vmem:[%s204 + $0x130] sm:$0xff]
      %v1389 = vld [vmem:[%s204 + $0x138] sm:$0xff]
      %v1390 = vld [vmem:[%s204 + $0x140] sm:$0xff]
      %v1391 = vld [vmem:[%s204 + $0x148] sm:$0xff]
      %v1392 = vld [vmem:[%s204 + $0x150] sm:$0xff]
      %v1393 = vld [vmem:[%s204 + $0x158] sm:$0xff]
      %v1394 = vld [vmem:[%s204 + $0x160] sm:$0xff]
      %v1395 = vld [vmem:[%s204 + $0x168] sm:$0xff]
      %v1396 = vld [vmem:[%s204 + $0x170] sm:$0xff]
      %v1397 = vld [vmem:[%s204 + $0x178] sm:$0xff]
      %v1398 = vld [vmem:[%s204 + $0x180] sm:$0xff]
      %v1399 = vld [vmem:[%s204 + $0x188] sm:$0xff]
      %v1400 = vld [vmem:[%s204 + $0x190] sm:$0xff]
      %v1401 = vld [vmem:[%s204 + $0x198] sm:$0xff]
      %v1402 = vld [vmem:[%s204 + $0x1a0] sm:$0xff]
      %v1403 = vld [vmem:[%s204 + $0x1a8] sm:$0xff]
      %v1404 = vld [vmem:[%s204 + $0x1b0] sm:$0xff]
      %v1405 = vld [vmem:[%s204 + $0x1b8] sm:$0xff]
      %v1406 = vld [vmem:[%s204 + $0x1c0] sm:$0xff]
      %v1407 = vld [vmem:[%s204 + $0x1c8] sm:$0xff]
      %v1408 = vld [vmem:[%s204 + $0x1d0] sm:$0xff]
      %v1409 = vld [vmem:[%s204 + $0x1d8] sm:$0xff]
      %v1410 = vld [vmem:[%s204 + $0x1e0] sm:$0xff]
      %v1411 = vld [vmem:[%s204 + $0x1e8] sm:$0xff]
      %v1412 = vld [vmem:[%s204 + $0x1f0] sm:$0xff]
      %v1413 = vld [vmem:[%s204 + $0x1f8] sm:$0xff]
      %v1414 = vld [vmem:[%s204 + $0x200] sm:$0xff]
      %v1415 = vld [vmem:[%s204 + $0x208] sm:$0xff]
      %v1416 = vld [vmem:[%s204 + $0x210] sm:$0xff]
      %v1417 = vld [vmem:[%s204 + $0x218] sm:$0xff]
      %v1418 = vld [vmem:[%s204 + $0x220] sm:$0xff]
      %v1419 = vld [vmem:[%s204 + $0x228] sm:$0xff]
      %v1420 = vld [vmem:[%s204 + $0x230] sm:$0xff]
      %v1421 = vld [vmem:[%s204 + $0x238] sm:$0xff]
      %v1422 = vld [vmem:[%s204 + $0x240] sm:$0xff]
      %v1423 = vld [vmem:[%s204 + $0x248] sm:$0xff]
      %v1424 = vld [vmem:[%s204 + $0x250] sm:$0xff]
      %v1425 = vld [vmem:[%s204 + $0x258] sm:$0xff]
      %v1426 = vld [vmem:[%s204 + $0x260] sm:$0xff]
      %v1427 = vld [vmem:[%s204 + $0x268] sm:$0xff]
      %v1428 = vld [vmem:[%s204 + $0x270] sm:$0xff]
      %v1429 = vld [vmem:[%s204 + $0x278] sm:$0xff]
      %v1430 = vld [vmem:[%s204 + $0x280] sm:$0xff]
      %v1431 = vld [vmem:[%s204 + $0x288] sm:$0xff]
      %v1432 = vld [vmem:[%s204 + $0x290] sm:$0xff]
      %v1433 = vld [vmem:[%s204 + $0x298] sm:$0xff]
      %v1434 = vld [vmem:[%s204 + $0x2a0] sm:$0xff]
      %v1435 = vld [vmem:[%s204 + $0x2a8] sm:$0xff]
      %v1436 = vld [vmem:[%s204 + $0x2b0] sm:$0xff]
      %v1437 = vmul.f32 %v1263, %v1350
      %v1438 = vmul.f32 %v1264, %v1351
      %v1439 = vmul.f32 %v1265, %v1352
      %v1440 = vmul.f32 %v1266, %v1353
      %v1441 = vmul.f32 %v1267, %v1354
      %v1442 = vmul.f32 %v1268, %v1355
      %v1443 = vmul.f32 %v1269, %v1356
      %v1444 = vmul.f32 %v1270, %v1357
      %v1445 = vmul.f32 %v1271, %v1358
      %v1446 = vmul.f32 %v1272, %v1359
      %v1447 = vmul.f32 %v1273, %v1360
      %v1448 = vmul.f32 %v1274, %v1361
      %v1449 = vmul.f32 %v1275, %v1362
      %v1450 = vmul.f32 %v1276, %v1363
      %v1451 = vmul.f32 %v1277, %v1364
      %v1452 = vmul.f32 %v1278, %v1365
      %v1453 = vmul.f32 %v1279, %v1366
      %v1454 = vmul.f32 %v1280, %v1367
      %v1455 = vmul.f32 %v1281, %v1368
      %v1456 = vmul.f32 %v1282, %v1369
      %v1457 = vmul.f32 %v1283, %v1370
      %v1458 = vmul.f32 %v1284, %v1371
      %v1459 = vmul.f32 %v1285, %v1372
      %v1460 = vmul.f32 %v1286, %v1373
      %v1461 = vmul.f32 %v1287, %v1374
      %v1462 = vmul.f32 %v1288, %v1375
      %v1463 = vmul.f32 %v1289, %v1376
      %v1464 = vmul.f32 %v1290, %v1377
      %v1465 = vmul.f32 %v1291, %v1378
      %v1466 = vmul.f32 %v1292, %v1379
      %v1467 = vmul.f32 %v1293, %v1380
      %v1468 = vmul.f32 %v1294, %v1381
      %v1469 = vmul.f32 %v1295, %v1382
      %v1470 = vmul.f32 %v1296, %v1383
      %v1471 = vmul.f32 %v1297, %v1384
      %v1472 = vmul.f32 %v1298, %v1385
      %v1473 = vmul.f32 %v1299, %v1386
      %v1474 = vmul.f32 %v1300, %v1387
      %v1475 = vmul.f32 %v1301, %v1388
      %v1476 = vmul.f32 %v1302, %v1389
      %v1477 = vmul.f32 %v1303, %v1390
      %v1478 = vmul.f32 %v1304, %v1391
      %v1479 = vmul.f32 %v1305, %v1392
      %v1480 = vmul.f32 %v1306, %v1393
      %v1481 = vmul.f32 %v1307, %v1394
      %v1482 = vmul.f32 %v1308, %v1395
      %v1483 = vmul.f32 %v1309, %v1396
      %v1484 = vmul.f32 %v1310, %v1397
      %v1485 = vmul.f32 %v1311, %v1398
      %v1486 = vmul.f32 %v1312, %v1399
      %v1487 = vmul.f32 %v1313, %v1400
      %v1488 = vmul.f32 %v1314, %v1401
      %v1489 = vmul.f32 %v1315, %v1402
      %v1490 = vmul.f32 %v1316, %v1403
      %v1491 = vmul.f32 %v1317, %v1404
      %v1492 = vmul.f32 %v1318, %v1405
      %v1493 = vmul.f32 %v1319, %v1406
      %v1494 = vmul.f32 %v1320, %v1407
      %v1495 = vmul.f32 %v1321, %v1408
      %v1496 = vmul.f32 %v1322, %v1409
      %v1497 = vmul.f32 %v1323, %v1410
      %v1498 = vmul.f32 %v1324, %v1411
      %v1499 = vmul.f32 %v1325, %v1412
      %v1500 = vmul.f32 %v1326, %v1413
      %v1501 = vmul.f32 %v1327, %v1414
      %v1502 = vmul.f32 %v1328, %v1415
      %v1503 = vmul.f32 %v1329, %v1416
      %v1504 = vmul.f32 %v1330, %v1417
      %v1505 = vmul.f32 %v1331, %v1418
      %v1506 = vmul.f32 %v1332, %v1419
      %v1507 = vmul.f32 %v1333, %v1420
      %v1508 = vmul.f32 %v1334, %v1421
      %v1509 = vmul.f32 %v1335, %v1422
      %v1510 = vmul.f32 %v1336, %v1423
      %v1511 = vmul.f32 %v1337, %v1424
      %v1512 = vmul.f32 %v1338, %v1425
      %v1513 = vmul.f32 %v1339, %v1426
      %v1514 = vmul.f32 %v1340, %v1427
      %v1515 = vmul.f32 %v1341, %v1428
      %v1516 = vmul.f32 %v1342, %v1429
      %v1517 = vmul.f32 %v1343, %v1430
      %v1518 = vmul.f32 %v1344, %v1431
      %v1519 = vmul.f32 %v1345, %v1432
      %v1520 = vmul.f32 %v1346, %v1433
      %v1521 = vmul.f32 %v1347, %v1434
      %v1522 = vmul.f32 %v1348, %v1435
      %v1523 = vmul.f32 %v1349, %v1436
      %v1524 = vld [vmem:[%s210] sm:$0xff]
      %v1525 = vld [vmem:[%s210 + $0x8] sm:$0xff]
      %v1526 = vld [vmem:[%s210 + $0x10] sm:$0xff]
      %v1527 = vld [vmem:[%s210 + $0x18] sm:$0xff]
      %v1528 = vld [vmem:[%s210 + $0x20] sm:$0xff]
      %v1529 = vld [vmem:[%s210 + $0x28] sm:$0xff]
      %v1530 = vld [vmem:[%s210 + $0x30] sm:$0xff]
      %v1531 = vld [vmem:[%s210 + $0x38] sm:$0xff]
      %v1532 = vld [vmem:[%s210 + $0x40] sm:$0xff]
      %v1533 = vld [vmem:[%s210 + $0x48] sm:$0xff]
      %v1534 = vld [vmem:[%s210 + $0x50] sm:$0xff]
      %v1535 = vld [vmem:[%s210 + $0x58] sm:$0xff]
      %v1536 = vld [vmem:[%s210 + $0x60] sm:$0xff]
      %v1537 = vld [vmem:[%s210 + $0x68] sm:$0xff]
      %v1538 = vld [vmem:[%s210 + $0x70] sm:$0xff]
      %v1539 = vld [vmem:[%s210 + $0x78] sm:$0xff]
      %v1540 = vld [vmem:[%s210 + $0x80] sm:$0xff]
      %v1541 = vld [vmem:[%s210 + $0x88] sm:$0xff]
      %v1542 = vld [vmem:[%s210 + $0x90] sm:$0xff]
      %v1543 = vld [vmem:[%s210 + $0x98] sm:$0xff]
      %v1544 = vld [vmem:[%s210 + $0xa0] sm:$0xff]
      %v1545 = vld [vmem:[%s210 + $0xa8] sm:$0xff]
      %v1546 = vld [vmem:[%s210 + $0xb0] sm:$0xff]
      %v1547 = vld [vmem:[%s210 + $0xb8] sm:$0xff]
      %v1548 = vld [vmem:[%s210 + $0xc0] sm:$0xff]
      %v1549 = vld [vmem:[%s210 + $0xc8] sm:$0xff]
      %v1550 = vld [vmem:[%s210 + $0xd0] sm:$0xff]
      %v1551 = vld [vmem:[%s210 + $0xd8] sm:$0xff]
      %v1552 = vld [vmem:[%s210 + $0xe0] sm:$0xff]
      %v1553 = vld [vmem:[%s210 + $0xe8] sm:$0xff]
      %v1554 = vld [vmem:[%s210 + $0xf0] sm:$0xff]
      %v1555 = vld [vmem:[%s210 + $0xf8] sm:$0xff]
      %v1556 = vld [vmem:[%s210 + $0x100] sm:$0xff]
      %v1557 = vld [vmem:[%s210 + $0x108] sm:$0xff]
      %v1558 = vld [vmem:[%s210 + $0x110] sm:$0xff]
      %v1559 = vld [vmem:[%s210 + $0x118] sm:$0xff]
      %v1560 = vld [vmem:[%s210 + $0x120] sm:$0xff]
      %v1561 = vld [vmem:[%s210 + $0x128] sm:$0xff]
      %v1562 = vld [vmem:[%s210 + $0x130] sm:$0xff]
      %v1563 = vld [vmem:[%s210 + $0x138] sm:$0xff]
      %v1564 = vld [vmem:[%s210 + $0x140] sm:$0xff]
      %v1565 = vld [vmem:[%s210 + $0x148] sm:$0xff]
      %v1566 = vld [vmem:[%s210 + $0x150] sm:$0xff]
      %v1567 = vld [vmem:[%s210 + $0x158] sm:$0xff]
      %v1568 = vld [vmem:[%s210 + $0x160] sm:$0xff]
      %v1569 = vld [vmem:[%s210 + $0x168] sm:$0xff]
      %v1570 = vld [vmem:[%s210 + $0x170] sm:$0xff]
      %v1571 = vld [vmem:[%s210 + $0x178] sm:$0xff]
      %v1572 = vld [vmem:[%s210 + $0x180] sm:$0xff]
      %v1573 = vld [vmem:[%s210 + $0x188] sm:$0xff]
      %v1574 = vld [vmem:[%s210 + $0x190] sm:$0xff]
      %v1575 = vld [vmem:[%s210 + $0x198] sm:$0xff]
      %v1576 = vld [vmem:[%s210 + $0x1a0] sm:$0xff]
      %v1577 = vld [vmem:[%s210 + $0x1a8] sm:$0xff]
      %v1578 = vld [vmem:[%s210 + $0x1b0] sm:$0xff]
      %v1579 = vld [vmem:[%s210 + $0x1b8] sm:$0xff]
      %v1580 = vld [vmem:[%s210 + $0x1c0] sm:$0xff]
      %v1581 = vld [vmem:[%s210 + $0x1c8] sm:$0xff]
      %v1582 = vld [vmem:[%s210 + $0x1d0] sm:$0xff]
      %v1583 = vld [vmem:[%s210 + $0x1d8] sm:$0xff]
      %v1584 = vld [vmem:[%s210 + $0x1e0] sm:$0xff]
      %v1585 = vld [vmem:[%s210 + $0x1e8] sm:$0xff]
      %v1586 = vld [vmem:[%s210 + $0x1f0] sm:$0xff]
      %v1587 = vld [vmem:[%s210 + $0x1f8] sm:$0xff]
      %v1588 = vld [vmem:[%s210 + $0x200] sm:$0xff]
      %v1589 = vld [vmem:[%s210 + $0x208] sm:$0xff]
      %v1590 = vld [vmem:[%s210 + $0x210] sm:$0xff]
      %v1591 = vld [vmem:[%s210 + $0x218] sm:$0xff]
      %v1592 = vld [vmem:[%s210 + $0x220] sm:$0xff]
      %v1593 = vld [vmem:[%s210 + $0x228] sm:$0xff]
      %v1594 = vld [vmem:[%s210 + $0x230] sm:$0xff]
      %v1595 = vld [vmem:[%s210 + $0x238] sm:$0xff]
      %v1596 = vld [vmem:[%s210 + $0x240] sm:$0xff]
      %v1597 = vld [vmem:[%s210 + $0x248] sm:$0xff]
      %v1598 = vld [vmem:[%s210 + $0x250] sm:$0xff]
      %v1599 = vld [vmem:[%s210 + $0x258] sm:$0xff]
      %v1600 = vld [vmem:[%s210 + $0x260] sm:$0xff]
      %v1601 = vld [vmem:[%s210 + $0x268] sm:$0xff]
      %v1602 = vld [vmem:[%s210 + $0x270] sm:$0xff]
      %v1603 = vld [vmem:[%s210 + $0x278] sm:$0xff]
      %v1604 = vld [vmem:[%s210 + $0x280] sm:$0xff]
      %v1605 = vld [vmem:[%s210 + $0x288] sm:$0xff]
      %v1606 = vld [vmem:[%s210 + $0x290] sm:$0xff]
      %v1607 = vld [vmem:[%s210 + $0x298] sm:$0xff]
      %v1608 = vld [vmem:[%s210 + $0x2a0] sm:$0xff]
      %v1609 = vld [vmem:[%s210 + $0x2a8] sm:$0xff]
      %v1610 = vld [vmem:[%s210 + $0x2b0] sm:$0xff]
      %1612 = vset.pattern.permute.xlu0 0
      %1613 = vperm.xlu0 %1612, %v1437
      %v1614 = vpop.permute.xlu0 %1613
      %1617 = vset.pattern.permute.xlu0 0
      %1618 = vperm.xlu0 %1617, %v1438
      %v1619 = vpop.permute.xlu0 %1618
      %1622 = vset.pattern.permute.xlu0 0
      %1623 = vperm.xlu0 %1622, %v1439
      %v1624 = vpop.permute.xlu0 %1623
      %1627 = vset.pattern.permute.xlu0 0
      %1628 = vperm.xlu0 %1627, %v1440
      %v1629 = vpop.permute.xlu0 %1628
      %1632 = vset.pattern.permute.xlu0 0
      %1633 = vperm.xlu0 %1632, %v1441
      %v1634 = vpop.permute.xlu0 %1633
      %1637 = vset.pattern.permute.xlu0 0
      %1638 = vperm.xlu0 %1637, %v1442
      %v1639 = vpop.permute.xlu0 %1638
      %1642 = vset.pattern.permute.xlu0 0
      %1643 = vperm.xlu0 %1642, %v1443
      %v1644 = vpop.permute.xlu0 %1643
      %1647 = vset.pattern.permute.xlu0 0
      %1648 = vperm.xlu0 %1647, %v1444
      %v1649 = vpop.permute.xlu0 %1648
      %1652 = vset.pattern.permute.xlu0 0
      %1653 = vperm.xlu0 %1652, %v1445
      %v1654 = vpop.permute.xlu0 %1653
      %1657 = vset.pattern.permute.xlu0 0
      %1658 = vperm.xlu0 %1657, %v1446
      %v1659 = vpop.permute.xlu0 %1658
      %1662 = vset.pattern.permute.xlu0 0
      %1663 = vperm.xlu0 %1662, %v1447
      %v1664 = vpop.permute.xlu0 %1663
      %1667 = vset.pattern.permute.xlu0 0
      %1668 = vperm.xlu0 %1667, %v1448
      %v1669 = vpop.permute.xlu0 %1668
      %1672 = vset.pattern.permute.xlu0 0
      %1673 = vperm.xlu0 %1672, %v1449
      %v1674 = vpop.permute.xlu0 %1673
      %1677 = vset.pattern.permute.xlu0 0
      %1678 = vperm.xlu0 %1677, %v1450
      %v1679 = vpop.permute.xlu0 %1678
      %1682 = vset.pattern.permute.xlu0 0
      %1683 = vperm.xlu0 %1682, %v1451
      %v1684 = vpop.permute.xlu0 %1683
      %1687 = vset.pattern.permute.xlu0 0
      %1688 = vperm.xlu0 %1687, %v1452
      %v1689 = vpop.permute.xlu0 %1688
      %1692 = vset.pattern.permute.xlu0 0
      %1693 = vperm.xlu0 %1692, %v1453
      %v1694 = vpop.permute.xlu0 %1693
      %1697 = vset.pattern.permute.xlu0 0
      %1698 = vperm.xlu0 %1697, %v1454
      %v1699 = vpop.permute.xlu0 %1698
      %1702 = vset.pattern.permute.xlu0 0
      %1703 = vperm.xlu0 %1702, %v1455
      %v1704 = vpop.permute.xlu0 %1703
      %1707 = vset.pattern.permute.xlu0 0
      %1708 = vperm.xlu0 %1707, %v1456
      %v1709 = vpop.permute.xlu0 %1708
      %1712 = vset.pattern.permute.xlu0 0
      %1713 = vperm.xlu0 %1712, %v1457
      %v1714 = vpop.permute.xlu0 %1713
      %1717 = vset.pattern.permute.xlu0 0
      %1718 = vperm.xlu0 %1717, %v1458
      %v1719 = vpop.permute.xlu0 %1718
      %1722 = vset.pattern.permute.xlu0 0
      %1723 = vperm.xlu0 %1722, %v1459
      %v1724 = vpop.permute.xlu0 %1723
      %1727 = vset.pattern.permute.xlu0 0
      %1728 = vperm.xlu0 %1727, %v1460
      %v1729 = vpop.permute.xlu0 %1728
      %1732 = vset.pattern.permute.xlu0 0
      %1733 = vperm.xlu0 %1732, %v1461
      %v1734 = vpop.permute.xlu0 %1733
      %1737 = vset.pattern.permute.xlu0 0
      %1738 = vperm.xlu0 %1737, %v1462
      %v1739 = vpop.permute.xlu0 %1738
      %1742 = vset.pattern.permute.xlu0 0
      %1743 = vperm.xlu0 %1742, %v1463
      %v1744 = vpop.permute.xlu0 %1743
      %1747 = vset.pattern.permute.xlu0 0
      %1748 = vperm.xlu0 %1747, %v1464
      %v1749 = vpop.permute.xlu0 %1748
      %1752 = vset.pattern.permute.xlu0 0
      %1753 = vperm.xlu0 %1752, %v1465
      %v1754 = vpop.permute.xlu0 %1753
      %1757 = vset.pattern.permute.xlu0 0
      %1758 = vperm.xlu0 %1757, %v1466
      %v1759 = vpop.permute.xlu0 %1758
      %1762 = vset.pattern.permute.xlu0 0
      %1763 = vperm.xlu0 %1762, %v1467
      %v1764 = vpop.permute.xlu0 %1763
      %1767 = vset.pattern.permute.xlu0 0
      %1768 = vperm.xlu0 %1767, %v1468
      %v1769 = vpop.permute.xlu0 %1768
      %1772 = vset.pattern.permute.xlu0 0
      %1773 = vperm.xlu0 %1772, %v1469
      %v1774 = vpop.permute.xlu0 %1773
      %1777 = vset.pattern.permute.xlu0 0
      %1778 = vperm.xlu0 %1777, %v1470
      %v1779 = vpop.permute.xlu0 %1778
      %1782 = vset.pattern.permute.xlu0 0
      %1783 = vperm.xlu0 %1782, %v1471
      %v1784 = vpop.permute.xlu0 %1783
      %1787 = vset.pattern.permute.xlu0 0
      %1788 = vperm.xlu0 %1787, %v1472
      %v1789 = vpop.permute.xlu0 %1788
      %1792 = vset.pattern.permute.xlu0 0
      %1793 = vperm.xlu0 %1792, %v1473
      %v1794 = vpop.permute.xlu0 %1793
      %1797 = vset.pattern.permute.xlu0 0
      %1798 = vperm.xlu0 %1797, %v1474
      %v1799 = vpop.permute.xlu0 %1798
      %1802 = vset.pattern.permute.xlu0 0
      %1803 = vperm.xlu0 %1802, %v1475
      %v1804 = vpop.permute.xlu0 %1803
      %1807 = vset.pattern.permute.xlu0 0
      %1808 = vperm.xlu0 %1807, %v1476
      %v1809 = vpop.permute.xlu0 %1808
      %1812 = vset.pattern.permute.xlu0 0
      %1813 = vperm.xlu0 %1812, %v1477
      %v1814 = vpop.permute.xlu0 %1813
      %1817 = vset.pattern.permute.xlu0 0
      %1818 = vperm.xlu0 %1817, %v1478
      %v1819 = vpop.permute.xlu0 %1818
      %1822 = vset.pattern.permute.xlu0 0
      %1823 = vperm.xlu0 %1822, %v1479
      %v1824 = vpop.permute.xlu0 %1823
      %1827 = vset.pattern.permute.xlu0 0
      %1828 = vperm.xlu0 %1827, %v1480
      %v1829 = vpop.permute.xlu0 %1828
      %1832 = vset.pattern.permute.xlu0 0
      %1833 = vperm.xlu0 %1832, %v1481
      %v1834 = vpop.permute.xlu0 %1833
      %1837 = vset.pattern.permute.xlu0 0
      %1838 = vperm.xlu0 %1837, %v1482
      %v1839 = vpop.permute.xlu0 %1838
      %1842 = vset.pattern.permute.xlu0 0
      %1843 = vperm.xlu0 %1842, %v1483
      %v1844 = vpop.permute.xlu0 %1843
      %1847 = vset.pattern.permute.xlu0 0
      %1848 = vperm.xlu0 %1847, %v1484
      %v1849 = vpop.permute.xlu0 %1848
      %1852 = vset.pattern.permute.xlu0 0
      %1853 = vperm.xlu0 %1852, %v1485
      %v1854 = vpop.permute.xlu0 %1853
      %1857 = vset.pattern.permute.xlu0 0
      %1858 = vperm.xlu0 %1857, %v1486
      %v1859 = vpop.permute.xlu0 %1858
      %1862 = vset.pattern.permute.xlu0 0
      %1863 = vperm.xlu0 %1862, %v1487
      %v1864 = vpop.permute.xlu0 %1863
      %1867 = vset.pattern.permute.xlu0 0
      %1868 = vperm.xlu0 %1867, %v1488
      %v1869 = vpop.permute.xlu0 %1868
      %1872 = vset.pattern.permute.xlu0 0
      %1873 = vperm.xlu0 %1872, %v1489
      %v1874 = vpop.permute.xlu0 %1873
      %1877 = vset.pattern.permute.xlu0 0
      %1878 = vperm.xlu0 %1877, %v1490
      %v1879 = vpop.permute.xlu0 %1878
      %1882 = vset.pattern.permute.xlu0 0
      %1883 = vperm.xlu0 %1882, %v1491
      %v1884 = vpop.permute.xlu0 %1883
      %1887 = vset.pattern.permute.xlu0 0
      %1888 = vperm.xlu0 %1887, %v1492
      %v1889 = vpop.permute.xlu0 %1888
      %1892 = vset.pattern.permute.xlu0 0
      %1893 = vperm.xlu0 %1892, %v1493
      %v1894 = vpop.permute.xlu0 %1893
      %1897 = vset.pattern.permute.xlu0 0
      %1898 = vperm.xlu0 %1897, %v1494
      %v1899 = vpop.permute.xlu0 %1898
      %1902 = vset.pattern.permute.xlu0 0
      %1903 = vperm.xlu0 %1902, %v1495
      %v1904 = vpop.permute.xlu0 %1903
      %1907 = vset.pattern.permute.xlu0 0
      %1908 = vperm.xlu0 %1907, %v1496
      %v1909 = vpop.permute.xlu0 %1908
      %1912 = vset.pattern.permute.xlu0 0
      %1913 = vperm.xlu0 %1912, %v1497
      %v1914 = vpop.permute.xlu0 %1913
      %1917 = vset.pattern.permute.xlu0 0
      %1918 = vperm.xlu0 %1917, %v1498
      %v1919 = vpop.permute.xlu0 %1918
      %1922 = vset.pattern.permute.xlu0 0
      %1923 = vperm.xlu0 %1922, %v1499
      %v1924 = vpop.permute.xlu0 %1923
      %1927 = vset.pattern.permute.xlu0 0
      %1928 = vperm.xlu0 %1927, %v1500
      %v1929 = vpop.permute.xlu0 %1928
      %1932 = vset.pattern.permute.xlu0 0
      %1933 = vperm.xlu0 %1932, %v1501
      %v1934 = vpop.permute.xlu0 %1933
      %1937 = vset.pattern.permute.xlu0 0
      %1938 = vperm.xlu0 %1937, %v1502
      %v1939 = vpop.permute.xlu0 %1938
      %1942 = vset.pattern.permute.xlu0 0
      %1943 = vperm.xlu0 %1942, %v1503
      %v1944 = vpop.permute.xlu0 %1943
      %1947 = vset.pattern.permute.xlu0 0
      %1948 = vperm.xlu0 %1947, %v1504
      %v1949 = vpop.permute.xlu0 %1948
      %1952 = vset.pattern.permute.xlu0 0
      %1953 = vperm.xlu0 %1952, %v1505
      %v1954 = vpop.permute.xlu0 %1953
      %1957 = vset.pattern.permute.xlu0 0
      %1958 = vperm.xlu0 %1957, %v1506
      %v1959 = vpop.permute.xlu0 %1958
      %1962 = vset.pattern.permute.xlu0 0
      %1963 = vperm.xlu0 %1962, %v1507
      %v1964 = vpop.permute.xlu0 %1963
      %1967 = vset.pattern.permute.xlu0 0
      %1968 = vperm.xlu0 %1967, %v1508
      %v1969 = vpop.permute.xlu0 %1968
      %1972 = vset.pattern.permute.xlu0 0
      %1973 = vperm.xlu0 %1972, %v1509
      %v1974 = vpop.permute.xlu0 %1973
      %1977 = vset.pattern.permute.xlu0 0
      %1978 = vperm.xlu0 %1977, %v1510
      %v1979 = vpop.permute.xlu0 %1978
      %1982 = vset.pattern.permute.xlu0 0
      %1983 = vperm.xlu0 %1982, %v1511
      %v1984 = vpop.permute.xlu0 %1983
      %1987 = vset.pattern.permute.xlu0 0
      %1988 = vperm.xlu0 %1987, %v1512
      %v1989 = vpop.permute.xlu0 %1988
      %1992 = vset.pattern.permute.xlu0 0
      %1993 = vperm.xlu0 %1992, %v1513
      %v1994 = vpop.permute.xlu0 %1993
      %1997 = vset.pattern.permute.xlu0 0
      %1998 = vperm.xlu0 %1997, %v1514
      %v1999 = vpop.permute.xlu0 %1998
      %2002 = vset.pattern.permute.xlu0 0
      %2003 = vperm.xlu0 %2002, %v1515
      %v2004 = vpop.permute.xlu0 %2003
      %2007 = vset.pattern.permute.xlu0 0
      %2008 = vperm.xlu0 %2007, %v1516
      %v2009 = vpop.permute.xlu0 %2008
      %2012 = vset.pattern.permute.xlu0 0
      %2013 = vperm.xlu0 %2012, %v1517
      %v2014 = vpop.permute.xlu0 %2013
      %2017 = vset.pattern.permute.xlu0 0
      %2018 = vperm.xlu0 %2017, %v1518
      %v2019 = vpop.permute.xlu0 %2018
      %2022 = vset.pattern.permute.xlu0 0
      %2023 = vperm.xlu0 %2022, %v1519
      %v2024 = vpop.permute.xlu0 %2023
      %2027 = vset.pattern.permute.xlu0 0
      %2028 = vperm.xlu0 %2027, %v1520
      %v2029 = vpop.permute.xlu0 %2028
      %2032 = vset.pattern.permute.xlu0 0
      %2033 = vperm.xlu0 %2032, %v1521
      %v2034 = vpop.permute.xlu0 %2033
      %2037 = vset.pattern.permute.xlu0 0
      %2038 = vperm.xlu0 %2037, %v1522
      %v2039 = vpop.permute.xlu0 %2038
      %2042 = vset.pattern.permute.xlu0 0
      %2043 = vperm.xlu0 %2042, %v1523
      %v2044 = vpop.permute.xlu0 %2043
      %v2046 = vmul.f32 %v654, %v1614
      %v2047 = vmul.f32 %v655, %v1619
      %v2048 = vmul.f32 %v656, %v1624
      %v2049 = vmul.f32 %v657, %v1629
      %v2050 = vmul.f32 %v658, %v1634
      %v2051 = vmul.f32 %v659, %v1639
      %v2052 = vmul.f32 %v660, %v1644
      %v2053 = vmul.f32 %v661, %v1649
      %v2054 = vmul.f32 %v662, %v1654
      %v2055 = vmul.f32 %v663, %v1659
      %v2056 = vmul.f32 %v664, %v1664
      %v2057 = vmul.f32 %v665, %v1669
      %v2058 = vmul.f32 %v666, %v1674
      %v2059 = vmul.f32 %v667, %v1679
      %v2060 = vmul.f32 %v668, %v1684
      %v2061 = vmul.f32 %v669, %v1689
      %v2062 = vmul.f32 %v670, %v1694
      %v2063 = vmul.f32 %v671, %v1699
      %v2064 = vmul.f32 %v672, %v1704
      %v2065 = vmul.f32 %v673, %v1709
      %v2066 = vmul.f32 %v674, %v1714
      %v2067 = vmul.f32 %v675, %v1719
      %v2068 = vmul.f32 %v676, %v1724
      %v2069 = vmul.f32 %v677, %v1729
      %v2070 = vmul.f32 %v678, %v1734
      %v2071 = vmul.f32 %v679, %v1739
      %v2072 = vmul.f32 %v680, %v1744
      %v2073 = vmul.f32 %v681, %v1749
      %v2074 = vmul.f32 %v682, %v1754
      %v2075 = vmul.f32 %v683, %v1759
      %v2076 = vmul.f32 %v684, %v1764
      %v2077 = vmul.f32 %v685, %v1769
      %v2078 = vmul.f32 %v686, %v1774
      %v2079 = vmul.f32 %v687, %v1779
      %v2080 = vmul.f32 %v688, %v1784
      %v2081 = vmul.f32 %v689, %v1789
      %v2082 = vmul.f32 %v690, %v1794
      %v2083 = vmul.f32 %v691, %v1799
      %v2084 = vmul.f32 %v692, %v1804
      %v2085 = vmul.f32 %v693, %v1809
      %v2086 = vmul.f32 %v694, %v1814
      %v2087 = vmul.f32 %v695, %v1819
      %v2088 = vmul.f32 %v696, %v1824
      %v2089 = vmul.f32 %v697, %v1829
      %v2090 = vmul.f32 %v698, %v1834
      %v2091 = vmul.f32 %v699, %v1839
      %v2092 = vmul.f32 %v700, %v1844
      %v2093 = vmul.f32 %v701, %v1849
      %v2094 = vmul.f32 %v702, %v1854
      %v2095 = vmul.f32 %v703, %v1859
      %v2096 = vmul.f32 %v704, %v1864
      %v2097 = vmul.f32 %v705, %v1869
      %v2098 = vmul.f32 %v706, %v1874
      %v2099 = vmul.f32 %v707, %v1879
      %v2100 = vmul.f32 %v708, %v1884
      %v2101 = vmul.f32 %v709, %v1889
      %v2102 = vmul.f32 %v710, %v1894
      %v2103 = vmul.f32 %v711, %v1899
      %v2104 = vmul.f32 %v712, %v1904
      %v2105 = vmul.f32 %v713, %v1909
      %v2106 = vmul.f32 %v714, %v1914
      %v2107 = vmul.f32 %v715, %v1919
      %v2108 = vmul.f32 %v716, %v1924
      %v2109 = vmul.f32 %v717, %v1929
      %v2110 = vmul.f32 %v718, %v1934
      %v2111 = vmul.f32 %v719, %v1939
      %v2112 = vmul.f32 %v720, %v1944
      %v2113 = vmul.f32 %v721, %v1949
      %v2114 = vmul.f32 %v722, %v1954
      %v2115 = vmul.f32 %v723, %v1959
      %v2116 = vmul.f32 %v724, %v1964
      %v2117 = vmul.f32 %v725, %v1969
      %v2118 = vmul.f32 %v726, %v1974
      %v2119 = vmul.f32 %v727, %v1979
      %v2120 = vmul.f32 %v728, %v1984
      %v2121 = vmul.f32 %v729, %v1989
      %v2122 = vmul.f32 %v730, %v1994
      %v2123 = vmul.f32 %v731, %v1999
      %v2124 = vmul.f32 %v732, %v2004
      %v2125 = vmul.f32 %v733, %v2009
      %v2126 = vmul.f32 %v734, %v2014
      %v2127 = vmul.f32 %v735, %v2019
      %v2128 = vmul.f32 %v736, %v2024
      %v2129 = vmul.f32 %v737, %v2029
      %v2130 = vmul.f32 %v738, %v2034
      %v2131 = vmul.f32 %v739, %v2039
      %v2132 = vmul.f32 %v740, %v2044
      %2134 = vset.pattern.permute.xlu0 0
      %2135 = vperm.xlu0 %2134, %v1524
      %v2136 = vpop.permute.xlu0 %2135
      %2139 = vset.pattern.permute.xlu0 0
      %2140 = vperm.xlu0 %2139, %v1525
      %v2141 = vpop.permute.xlu0 %2140
      %2144 = vset.pattern.permute.xlu0 0
      %2145 = vperm.xlu0 %2144, %v1526
      %v2146 = vpop.permute.xlu0 %2145
      %2149 = vset.pattern.permute.xlu0 0
      %2150 = vperm.xlu0 %2149, %v1527
      %v2151 = vpop.permute.xlu0 %2150
      %2154 = vset.pattern.permute.xlu0 0
      %2155 = vperm.xlu0 %2154, %v1528
      %v2156 = vpop.permute.xlu0 %2155
      %2159 = vset.pattern.permute.xlu0 0
      %2160 = vperm.xlu0 %2159, %v1529
      %v2161 = vpop.permute.xlu0 %2160
      %2164 = vset.pattern.permute.xlu0 0
      %2165 = vperm.xlu0 %2164, %v1530
      %v2166 = vpop.permute.xlu0 %2165
      %2169 = vset.pattern.permute.xlu0 0
      %2170 = vperm.xlu0 %2169, %v1531
      %v2171 = vpop.permute.xlu0 %2170
      %2174 = vset.pattern.permute.xlu0 0
      %2175 = vperm.xlu0 %2174, %v1532
      %v2176 = vpop.permute.xlu0 %2175
      %2179 = vset.pattern.permute.xlu0 0
      %2180 = vperm.xlu0 %2179, %v1533
      %v2181 = vpop.permute.xlu0 %2180
      %2184 = vset.pattern.permute.xlu0 0
      %2185 = vperm.xlu0 %2184, %v1534
      %v2186 = vpop.permute.xlu0 %2185
      %2189 = vset.pattern.permute.xlu0 0
      %2190 = vperm.xlu0 %2189, %v1535
      %v2191 = vpop.permute.xlu0 %2190
      %2194 = vset.pattern.permute.xlu0 0
      %2195 = vperm.xlu0 %2194, %v1536
      %v2196 = vpop.permute.xlu0 %2195
      %2199 = vset.pattern.permute.xlu0 0
      %2200 = vperm.xlu0 %2199, %v1537
      %v2201 = vpop.permute.xlu0 %2200
      %2204 = vset.pattern.permute.xlu0 0
      %2205 = vperm.xlu0 %2204, %v1538
      %v2206 = vpop.permute.xlu0 %2205
      %2209 = vset.pattern.permute.xlu0 0
      %2210 = vperm.xlu0 %2209, %v1539
      %v2211 = vpop.permute.xlu0 %2210
      %2214 = vset.pattern.permute.xlu0 0
      %2215 = vperm.xlu0 %2214, %v1540
      %v2216 = vpop.permute.xlu0 %2215
      %2219 = vset.pattern.permute.xlu0 0
      %2220 = vperm.xlu0 %2219, %v1541
      %v2221 = vpop.permute.xlu0 %2220
      %2224 = vset.pattern.permute.xlu0 0
      %2225 = vperm.xlu0 %2224, %v1542
      %v2226 = vpop.permute.xlu0 %2225
      %2229 = vset.pattern.permute.xlu0 0
      %2230 = vperm.xlu0 %2229, %v1543
      %v2231 = vpop.permute.xlu0 %2230
      %2234 = vset.pattern.permute.xlu0 0
      %2235 = vperm.xlu0 %2234, %v1544
      %v2236 = vpop.permute.xlu0 %2235
      %2239 = vset.pattern.permute.xlu0 0
      %2240 = vperm.xlu0 %2239, %v1545
      %v2241 = vpop.permute.xlu0 %2240
      %2244 = vset.pattern.permute.xlu0 0
      %2245 = vperm.xlu0 %2244, %v1546
      %v2246 = vpop.permute.xlu0 %2245
      %2249 = vset.pattern.permute.xlu0 0
      %2250 = vperm.xlu0 %2249, %v1547
      %v2251 = vpop.permute.xlu0 %2250
      %2254 = vset.pattern.permute.xlu0 0
      %2255 = vperm.xlu0 %2254, %v1548
      %v2256 = vpop.permute.xlu0 %2255
      %2259 = vset.pattern.permute.xlu0 0
      %2260 = vperm.xlu0 %2259, %v1549
      %v2261 = vpop.permute.xlu0 %2260
      %2264 = vset.pattern.permute.xlu0 0
      %2265 = vperm.xlu0 %2264, %v1550
      %v2266 = vpop.permute.xlu0 %2265
      %2269 = vset.pattern.permute.xlu0 0
      %2270 = vperm.xlu0 %2269, %v1551
      %v2271 = vpop.permute.xlu0 %2270
      %2274 = vset.pattern.permute.xlu0 0
      %2275 = vperm.xlu0 %2274, %v1552
      %v2276 = vpop.permute.xlu0 %2275
      %2279 = vset.pattern.permute.xlu0 0
      %2280 = vperm.xlu0 %2279, %v1553
      %v2281 = vpop.permute.xlu0 %2280
      %2284 = vset.pattern.permute.xlu0 0
      %2285 = vperm.xlu0 %2284, %v1554
      %v2286 = vpop.permute.xlu0 %2285
      %2289 = vset.pattern.permute.xlu0 0
      %2290 = vperm.xlu0 %2289, %v1555
      %v2291 = vpop.permute.xlu0 %2290
      %2294 = vset.pattern.permute.xlu0 0
      %2295 = vperm.xlu0 %2294, %v1556
      %v2296 = vpop.permute.xlu0 %2295
      %2299 = vset.pattern.permute.xlu0 0
      %2300 = vperm.xlu0 %2299, %v1557
      %v2301 = vpop.permute.xlu0 %2300
      %2304 = vset.pattern.permute.xlu0 0
      %2305 = vperm.xlu0 %2304, %v1558
      %v2306 = vpop.permute.xlu0 %2305
      %2309 = vset.pattern.permute.xlu0 0
      %2310 = vperm.xlu0 %2309, %v1559
      %v2311 = vpop.permute.xlu0 %2310
      %2314 = vset.pattern.permute.xlu0 0
      %2315 = vperm.xlu0 %2314, %v1560
      %v2316 = vpop.permute.xlu0 %2315
      %2319 = vset.pattern.permute.xlu0 0
      %2320 = vperm.xlu0 %2319, %v1561
      %v2321 = vpop.permute.xlu0 %2320
      %2324 = vset.pattern.permute.xlu0 0
      %2325 = vperm.xlu0 %2324, %v1562
      %v2326 = vpop.permute.xlu0 %2325
      %2329 = vset.pattern.permute.xlu0 0
      %2330 = vperm.xlu0 %2329, %v1563
      %v2331 = vpop.permute.xlu0 %2330
      %2334 = vset.pattern.permute.xlu0 0
      %2335 = vperm.xlu0 %2334, %v1564
      %v2336 = vpop.permute.xlu0 %2335
      %2339 = vset.pattern.permute.xlu0 0
      %2340 = vperm.xlu0 %2339, %v1565
      %v2341 = vpop.permute.xlu0 %2340
      %2344 = vset.pattern.permute.xlu0 0
      %2345 = vperm.xlu0 %2344, %v1566
      %v2346 = vpop.permute.xlu0 %2345
      %2349 = vset.pattern.permute.xlu0 0
      %2350 = vperm.xlu0 %2349, %v1567
      %v2351 = vpop.permute.xlu0 %2350
      %2354 = vset.pattern.permute.xlu0 0
      %2355 = vperm.xlu0 %2354, %v1568
      %v2356 = vpop.permute.xlu0 %2355
      %2359 = vset.pattern.permute.xlu0 0
      %2360 = vperm.xlu0 %2359, %v1569
      %v2361 = vpop.permute.xlu0 %2360
      %2364 = vset.pattern.permute.xlu0 0
      %2365 = vperm.xlu0 %2364, %v1570
      %v2366 = vpop.permute.xlu0 %2365
      %2369 = vset.pattern.permute.xlu0 0
      %2370 = vperm.xlu0 %2369, %v1571
      %v2371 = vpop.permute.xlu0 %2370
      %2374 = vset.pattern.permute.xlu0 0
      %2375 = vperm.xlu0 %2374, %v1572
      %v2376 = vpop.permute.xlu0 %2375
      %2379 = vset.pattern.permute.xlu0 0
      %2380 = vperm.xlu0 %2379, %v1573
      %v2381 = vpop.permute.xlu0 %2380
      %2384 = vset.pattern.permute.xlu0 0
      %2385 = vperm.xlu0 %2384, %v1574
      %v2386 = vpop.permute.xlu0 %2385
      %2389 = vset.pattern.permute.xlu0 0
      %2390 = vperm.xlu0 %2389, %v1575
      %v2391 = vpop.permute.xlu0 %2390
      %2394 = vset.pattern.permute.xlu0 0
      %2395 = vperm.xlu0 %2394, %v1576
      %v2396 = vpop.permute.xlu0 %2395
      %2399 = vset.pattern.permute.xlu0 0
      %2400 = vperm.xlu0 %2399, %v1577
      %v2401 = vpop.permute.xlu0 %2400
      %2404 = vset.pattern.permute.xlu0 0
      %2405 = vperm.xlu0 %2404, %v1578
      %v2406 = vpop.permute.xlu0 %2405
      %2409 = vset.pattern.permute.xlu0 0
      %2410 = vperm.xlu0 %2409, %v1579
      %v2411 = vpop.permute.xlu0 %2410
      %2414 = vset.pattern.permute.xlu0 0
      %2415 = vperm.xlu0 %2414, %v1580
      %v2416 = vpop.permute.xlu0 %2415
      %2419 = vset.pattern.permute.xlu0 0
      %2420 = vperm.xlu0 %2419, %v1581
      %v2421 = vpop.permute.xlu0 %2420
      %2424 = vset.pattern.permute.xlu0 0
      %2425 = vperm.xlu0 %2424, %v1582
      %v2426 = vpop.permute.xlu0 %2425
      %2429 = vset.pattern.permute.xlu0 0
      %2430 = vperm.xlu0 %2429, %v1583
      %v2431 = vpop.permute.xlu0 %2430
      %2434 = vset.pattern.permute.xlu0 0
      %2435 = vperm.xlu0 %2434, %v1584
      %v2436 = vpop.permute.xlu0 %2435
      %2439 = vset.pattern.permute.xlu0 0
      %2440 = vperm.xlu0 %2439, %v1585
      %v2441 = vpop.permute.xlu0 %2440
      %2444 = vset.pattern.permute.xlu0 0
      %2445 = vperm.xlu0 %2444, %v1586
      %v2446 = vpop.permute.xlu0 %2445
      %2449 = vset.pattern.permute.xlu0 0
      %2450 = vperm.xlu0 %2449, %v1587
      %v2451 = vpop.permute.xlu0 %2450
      %2454 = vset.pattern.permute.xlu0 0
      %2455 = vperm.xlu0 %2454, %v1588
      %v2456 = vpop.permute.xlu0 %2455
      %2459 = vset.pattern.permute.xlu0 0
      %2460 = vperm.xlu0 %2459, %v1589
      %v2461 = vpop.permute.xlu0 %2460
      %2464 = vset.pattern.permute.xlu0 0
      %2465 = vperm.xlu0 %2464, %v1590
      %v2466 = vpop.permute.xlu0 %2465
      %2469 = vset.pattern.permute.xlu0 0
      %2470 = vperm.xlu0 %2469, %v1591
      %v2471 = vpop.permute.xlu0 %2470
      %2474 = vset.pattern.permute.xlu0 0
      %2475 = vperm.xlu0 %2474, %v1592
      %v2476 = vpop.permute.xlu0 %2475
      %2479 = vset.pattern.permute.xlu0 0
      %2480 = vperm.xlu0 %2479, %v1593
      %v2481 = vpop.permute.xlu0 %2480
      %2484 = vset.pattern.permute.xlu0 0
      %2485 = vperm.xlu0 %2484, %v1594
      %v2486 = vpop.permute.xlu0 %2485
      %2489 = vset.pattern.permute.xlu0 0
      %2490 = vperm.xlu0 %2489, %v1595
      %v2491 = vpop.permute.xlu0 %2490
      %2494 = vset.pattern.permute.xlu0 0
      %2495 = vperm.xlu0 %2494, %v1596
      %v2496 = vpop.permute.xlu0 %2495
      %2499 = vset.pattern.permute.xlu0 0
      %2500 = vperm.xlu0 %2499, %v1597
      %v2501 = vpop.permute.xlu0 %2500
      %2504 = vset.pattern.permute.xlu0 0
      %2505 = vperm.xlu0 %2504, %v1598
      %v2506 = vpop.permute.xlu0 %2505
      %2509 = vset.pattern.permute.xlu0 0
      %2510 = vperm.xlu0 %2509, %v1599
      %v2511 = vpop.permute.xlu0 %2510
      %2514 = vset.pattern.permute.xlu0 0
      %2515 = vperm.xlu0 %2514, %v1600
      %v2516 = vpop.permute.xlu0 %2515
      %2519 = vset.pattern.permute.xlu0 0
      %2520 = vperm.xlu0 %2519, %v1601
      %v2521 = vpop.permute.xlu0 %2520
      %2524 = vset.pattern.permute.xlu0 0
      %2525 = vperm.xlu0 %2524, %v1602
      %v2526 = vpop.permute.xlu0 %2525
      %2529 = vset.pattern.permute.xlu0 0
      %2530 = vperm.xlu0 %2529, %v1603
      %v2531 = vpop.permute.xlu0 %2530
      %2534 = vset.pattern.permute.xlu0 0
      %2535 = vperm.xlu0 %2534, %v1604
      %v2536 = vpop.permute.xlu0 %2535
      %2539 = vset.pattern.permute.xlu0 0
      %2540 = vperm.xlu0 %2539, %v1605
      %v2541 = vpop.permute.xlu0 %2540
      %2544 = vset.pattern.permute.xlu0 0
      %2545 = vperm.xlu0 %2544, %v1606
      %v2546 = vpop.permute.xlu0 %2545
      %2549 = vset.pattern.permute.xlu0 0
      %2550 = vperm.xlu0 %2549, %v1607
      %v2551 = vpop.permute.xlu0 %2550
      %2554 = vset.pattern.permute.xlu0 0
      %2555 = vperm.xlu0 %2554, %v1608
      %v2556 = vpop.permute.xlu0 %2555
      %2559 = vset.pattern.permute.xlu0 0
      %2560 = vperm.xlu0 %2559, %v1609
      %v2561 = vpop.permute.xlu0 %2560
      %2564 = vset.pattern.permute.xlu0 0
      %2565 = vperm.xlu0 %2564, %v1610
      %v2566 = vpop.permute.xlu0 %2565
      %v2568 = vadd.f32 %v2046, %v2136
      %v2569 = vadd.f32 %v2047, %v2141
      %v2570 = vadd.f32 %v2048, %v2146
      %v2571 = vadd.f32 %v2049, %v2151
      %v2572 = vadd.f32 %v2050, %v2156
      %v2573 = vadd.f32 %v2051, %v2161
      %v2574 = vadd.f32 %v2052, %v2166
      %v2575 = vadd.f32 %v2053, %v2171
      %v2576 = vadd.f32 %v2054, %v2176
      %v2577 = vadd.f32 %v2055, %v2181
      %v2578 = vadd.f32 %v2056, %v2186
      %v2579 = vadd.f32 %v2057, %v2191
      %v2580 = vadd.f32 %v2058, %v2196
      %v2581 = vadd.f32 %v2059, %v2201
      %v2582 = vadd.f32 %v2060, %v2206
      %v2583 = vadd.f32 %v2061, %v2211
      %v2584 = vadd.f32 %v2062, %v2216
      %v2585 = vadd.f32 %v2063, %v2221
      %v2586 = vadd.f32 %v2064, %v2226
      %v2587 = vadd.f32 %v2065, %v2231
      %v2588 = vadd.f32 %v2066, %v2236
      %v2589 = vadd.f32 %v2067, %v2241
      %v2590 = vadd.f32 %v2068, %v2246
      %v2591 = vadd.f32 %v2069, %v2251
      %v2592 = vadd.f32 %v2070, %v2256
      %v2593 = vadd.f32 %v2071, %v2261
      %v2594 = vadd.f32 %v2072, %v2266
      %v2595 = vadd.f32 %v2073, %v2271
      %v2596 = vadd.f32 %v2074, %v2276
      %v2597 = vadd.f32 %v2075, %v2281
      %v2598 = vadd.f32 %v2076, %v2286
      %v2599 = vadd.f32 %v2077, %v2291
      %v2600 = vadd.f32 %v2078, %v2296
      %v2601 = vadd.f32 %v2079, %v2301
      %v2602 = vadd.f32 %v2080, %v2306
      %v2603 = vadd.f32 %v2081, %v2311
      %v2604 = vadd.f32 %v2082, %v2316
      %v2605 = vadd.f32 %v2083, %v2321
      %v2606 = vadd.f32 %v2084, %v2326
      %v2607 = vadd.f32 %v2085, %v2331
      %v2608 = vadd.f32 %v2086, %v2336
      %v2609 = vadd.f32 %v2087, %v2341
      %v2610 = vadd.f32 %v2088, %v2346
      %v2611 = vadd.f32 %v2089, %v2351
      %v2612 = vadd.f32 %v2090, %v2356
      %v2613 = vadd.f32 %v2091, %v2361
      %v2614 = vadd.f32 %v2092, %v2366
      %v2615 = vadd.f32 %v2093, %v2371
      %v2616 = vadd.f32 %v2094, %v2376
      %v2617 = vadd.f32 %v2095, %v2381
      %v2618 = vadd.f32 %v2096, %v2386
      %v2619 = vadd.f32 %v2097, %v2391
      %v2620 = vadd.f32 %v2098, %v2396
      %v2621 = vadd.f32 %v2099, %v2401
      %v2622 = vadd.f32 %v2100, %v2406
      %v2623 = vadd.f32 %v2101, %v2411
      %v2624 = vadd.f32 %v2102, %v2416
      %v2625 = vadd.f32 %v2103, %v2421
      %v2626 = vadd.f32 %v2104, %v2426
      %v2627 = vadd.f32 %v2105, %v2431
      %v2628 = vadd.f32 %v2106, %v2436
      %v2629 = vadd.f32 %v2107, %v2441
      %v2630 = vadd.f32 %v2108, %v2446
      %v2631 = vadd.f32 %v2109, %v2451
      %v2632 = vadd.f32 %v2110, %v2456
      %v2633 = vadd.f32 %v2111, %v2461
      %v2634 = vadd.f32 %v2112, %v2466
      %v2635 = vadd.f32 %v2113, %v2471
      %v2636 = vadd.f32 %v2114, %v2476
      %v2637 = vadd.f32 %v2115, %v2481
      %v2638 = vadd.f32 %v2116, %v2486
      %v2639 = vadd.f32 %v2117, %v2491
      %v2640 = vadd.f32 %v2118, %v2496
      %v2641 = vadd.f32 %v2119, %v2501
      %v2642 = vadd.f32 %v2120, %v2506
      %v2643 = vadd.f32 %v2121, %v2511
      %v2644 = vadd.f32 %v2122, %v2516
      %v2645 = vadd.f32 %v2123, %v2521
      %v2646 = vadd.f32 %v2124, %v2526
      %v2647 = vadd.f32 %v2125, %v2531
      %v2648 = vadd.f32 %v2126, %v2536
      %v2649 = vadd.f32 %v2127, %v2541
      %v2650 = vadd.f32 %v2128, %v2546
      %v2651 = vadd.f32 %v2129, %v2551
      %v2652 = vadd.f32 %v2130, %v2556
      %v2653 = vadd.f32 %v2131, %v2561
      %v2654 = vadd.f32 %v2132, %v2566
      %2655 = vst.msk [vmem:[%s216] sm:$0xff] %vm305, %v2568
      %2656 = vst.msk [vmem:[%s216 + $0x8] sm:$0xff] %vm305, %v2569
      %2657 = vst.msk [vmem:[%s216 + $0x10] sm:$0xff] %vm305, %v2570
      %2658 = vst.msk [vmem:[%s216 + $0x18] sm:$0xff] %vm305, %v2571
      %2659 = vst.msk [vmem:[%s216 + $0x20] sm:$0xff] %vm305, %v2572
      %2660 = vst.msk [vmem:[%s216 + $0x28] sm:$0xff] %vm305, %v2573
      %2661 = vst.msk [vmem:[%s216 + $0x30] sm:$0xff] %vm305, %v2574
      %2662 = vst.msk [vmem:[%s216 + $0x38] sm:$0xff] %vm305, %v2575
      %2663 = vst.msk [vmem:[%s216 + $0x40] sm:$0xff] %vm305, %v2576
      %2664 = vst.msk [vmem:[%s216 + $0x48] sm:$0xff] %vm305, %v2577
      %2665 = vst.msk [vmem:[%s216 + $0x50] sm:$0xff] %vm305, %v2578
      %2666 = vst.msk [vmem:[%s216 + $0x58] sm:$0xff] %vm305, %v2579
      %2667 = vst.msk [vmem:[%s216 + $0x60] sm:$0xff] %vm305, %v2580
      %2668 = vst.msk [vmem:[%s216 + $0x68] sm:$0xff] %vm305, %v2581
      %2669 = vst.msk [vmem:[%s216 + $0x70] sm:$0xff] %vm305, %v2582
      %2670 = vst.msk [vmem:[%s216 + $0x78] sm:$0xff] %vm305, %v2583
      %2671 = vst.msk [vmem:[%s216 + $0x80] sm:$0xff] %vm305, %v2584
      %2672 = vst.msk [vmem:[%s216 + $0x88] sm:$0xff] %vm305, %v2585
      %2673 = vst.msk [vmem:[%s216 + $0x90] sm:$0xff] %vm305, %v2586
      %2674 = vst.msk [vmem:[%s216 + $0x98] sm:$0xff] %vm305, %v2587
      %2675 = vst.msk [vmem:[%s216 + $0xa0] sm:$0xff] %vm305, %v2588
      %2676 = vst.msk [vmem:[%s216 + $0xa8] sm:$0xff] %vm305, %v2589
      %2677 = vst.msk [vmem:[%s216 + $0xb0] sm:$0xff] %vm305, %v2590
      %2678 = vst.msk [vmem:[%s216 + $0xb8] sm:$0xff] %vm305, %v2591
      %2679 = vst.msk [vmem:[%s216 + $0xc0] sm:$0xff] %vm305, %v2592
      %2680 = vst.msk [vmem:[%s216 + $0xc8] sm:$0xff] %vm305, %v2593
      %2681 = vst.msk [vmem:[%s216 + $0xd0] sm:$0xff] %vm305, %v2594
      %2682 = vst.msk [vmem:[%s216 + $0xd8] sm:$0xff] %vm305, %v2595
      %2683 = vst.msk [vmem:[%s216 + $0xe0] sm:$0xff] %vm305, %v2596
      %2684 = vst.msk [vmem:[%s216 + $0xe8] sm:$0xff] %vm305, %v2597
      %2685 = vst.msk [vmem:[%s216 + $0xf0] sm:$0xff] %vm305, %v2598
      %2686 = vst.msk [vmem:[%s216 + $0xf8] sm:$0xff] %vm305, %v2599
      %2687 = vst.msk [vmem:[%s216 + $0x100] sm:$0xff] %vm305, %v2600
      %2688 = vst.msk [vmem:[%s216 + $0x108] sm:$0xff] %vm305, %v2601
      %2689 = vst.msk [vmem:[%s216 + $0x110] sm:$0xff] %vm305, %v2602
      %2690 = vst.msk [vmem:[%s216 + $0x118] sm:$0xff] %vm305, %v2603
      %2691 = vst.msk [vmem:[%s216 + $0x120] sm:$0xff] %vm305, %v2604
      %2692 = vst.msk [vmem:[%s216 + $0x128] sm:$0xff] %vm305, %v2605
      %2693 = vst.msk [vmem:[%s216 + $0x130] sm:$0xff] %vm305, %v2606
      %2694 = vst.msk [vmem:[%s216 + $0x138] sm:$0xff] %vm305, %v2607
      %2695 = vst.msk [vmem:[%s216 + $0x140] sm:$0xff] %vm305, %v2608
      %2696 = vst.msk [vmem:[%s216 + $0x148] sm:$0xff] %vm305, %v2609
      %2697 = vst.msk [vmem:[%s216 + $0x150] sm:$0xff] %vm305, %v2610
      %2698 = vst.msk [vmem:[%s216 + $0x158] sm:$0xff] %vm305, %v2611
      %2699 = vst.msk [vmem:[%s216 + $0x160] sm:$0xff] %vm305, %v2612
      %2700 = vst.msk [vmem:[%s216 + $0x168] sm:$0xff] %vm305, %v2613
      %2701 = vst.msk [vmem:[%s216 + $0x170] sm:$0xff] %vm305, %v2614
      %2702 = vst.msk [vmem:[%s216 + $0x178] sm:$0xff] %vm305, %v2615
      %2703 = vst.msk [vmem:[%s216 + $0x180] sm:$0xff] %vm305, %v2616
      %2704 = vst.msk [vmem:[%s216 + $0x188] sm:$0xff] %vm305, %v2617
      %2705 = vst.msk [vmem:[%s216 + $0x190] sm:$0xff] %vm305, %v2618
      %2706 = vst.msk [vmem:[%s216 + $0x198] sm:$0xff] %vm305, %v2619
      %2707 = vst.msk [vmem:[%s216 + $0x1a0] sm:$0xff] %vm305, %v2620
      %2708 = vst.msk [vmem:[%s216 + $0x1a8] sm:$0xff] %vm305, %v2621
      %2709 = vst.msk [vmem:[%s216 + $0x1b0] sm:$0xff] %vm305, %v2622
      %2710 = vst.msk [vmem:[%s216 + $0x1b8] sm:$0xff] %vm305, %v2623
      %2711 = vst.msk [vmem:[%s216 + $0x1c0] sm:$0xff] %vm305, %v2624
      %2712 = vst.msk [vmem:[%s216 + $0x1c8] sm:$0xff] %vm305, %v2625
      %2713 = vst.msk [vmem:[%s216 + $0x1d0] sm:$0xff] %vm305, %v2626
      %2714 = vst.msk [vmem:[%s216 + $0x1d8] sm:$0xff] %vm305, %v2627
      %2715 = vst.msk [vmem:[%s216 + $0x1e0] sm:$0xff] %vm305, %v2628
      %2716 = vst.msk [vmem:[%s216 + $0x1e8] sm:$0xff] %vm305, %v2629
      %2717 = vst.msk [vmem:[%s216 + $0x1f0] sm:$0xff] %vm305, %v2630
      %2718 = vst.msk [vmem:[%s216 + $0x1f8] sm:$0xff] %vm305, %v2631
      %2719 = vst.msk [vmem:[%s216 + $0x200] sm:$0xff] %vm305, %v2632
      %2720 = vst.msk [vmem:[%s216 + $0x208] sm:$0xff] %vm305, %v2633
      %2721 = vst.msk [vmem:[%s216 + $0x210] sm:$0xff] %vm305, %v2634
      %2722 = vst.msk [vmem:[%s216 + $0x218] sm:$0xff] %vm305, %v2635
      %2723 = vst.msk [vmem:[%s216 + $0x220] sm:$0xff] %vm305, %v2636
      %2724 = vst.msk [vmem:[%s216 + $0x228] sm:$0xff] %vm305, %v2637
      %2725 = vst.msk [vmem:[%s216 + $0x230] sm:$0xff] %vm305, %v2638
      %2726 = vst.msk [vmem:[%s216 + $0x238] sm:$0xff] %vm305, %v2639
      %2727 = vst.msk [vmem:[%s216 + $0x240] sm:$0xff] %vm305, %v2640
      %2728 = vst.msk [vmem:[%s216 + $0x248] sm:$0xff] %vm305, %v2641
      %2729 = vst.msk [vmem:[%s216 + $0x250] sm:$0xff] %vm305, %v2642
      %2730 = vst.msk [vmem:[%s216 + $0x258] sm:$0xff] %vm305, %v2643
      %2731 = vst.msk [vmem:[%s216 + $0x260] sm:$0xff] %vm305, %v2644
      %2732 = vst.msk [vmem:[%s216 + $0x268] sm:$0xff] %vm305, %v2645
      %2733 = vst.msk [vmem:[%s216 + $0x270] sm:$0xff] %vm305, %v2646
      %2734 = vst.msk [vmem:[%s216 + $0x278] sm:$0xff] %vm305, %v2647
      %2735 = vst.msk [vmem:[%s216 + $0x280] sm:$0xff] %vm305, %v2648
      %2736 = vst.msk [vmem:[%s216 + $0x288] sm:$0xff] %vm305, %v2649
      %2737 = vst.msk [vmem:[%s216 + $0x290] sm:$0xff] %vm305, %v2650
      %2738 = vst.msk [vmem:[%s216 + $0x298] sm:$0xff] %vm305, %v2651
      %2739 = vst.msk [vmem:[%s216 + $0x2a0] sm:$0xff] %vm305, %v2652
      %2740 = vst.msk [vmem:[%s216 + $0x2a8] sm:$0xff] %vm305, %v2653
      %2741 = vst.msk [vmem:[%s216 + $0x2b0] sm:$0xff] %vm305, %v2654
      %s2742 = smul.u32 87, %s14
      %p2743 = scmp.lt.s32.totalorder %s2742, 173
      %s2744 = scalar_select %p2743, %s2742, 173
      %s2745 = smul.addr %s2744, 8
      %s2746 = scalar_lea.vmem %s3, %s2745
      // Predicated region
      $region33: #{tpu_custom_call.1} parent=31 // pred_check
        %p2747 = pneg %p110
      $region34: #{tpu_custom_call.1} parent=31 // pred_check_branch
        %2749 = sbr.rel (%p2747) target = $region36
      $region35: #{tpu_custom_call.1} parent=31 // pred_region
        %s2750 = smul.u32 87, %s14
      $region36: #{tpu_custom_call.1} parent=31 // pred_fallthru
        _
    $region32: #{tpu_custom_call.1} parent=5 // pred_fallthru
      _
    %p2751 = scmp.le.s32.totalorder 2, %s9
    // Predicated region
    $region37: #{tpu_custom_call.1} parent=5 // pred_check
      %p2752 = pneg %p2751
    $region38: #{tpu_custom_call.1} parent=5 // pred_check_branch
      %2754 = sbr.rel (%p2752) target = $region40
    $region39: #{tpu_custom_call.1} parent=5 // pred_region
      %s2755 = ssub.s32 %s9, 2
      // Predicated region
      $region41: #{tpu_custom_call.1} parent=39 // pred_check
        %p2756 = pneg %p116
      $region42: #{tpu_custom_call.1} parent=39 // pred_check_branch
        %2758 = sbr.rel (%p2756) target = $region44
      $region43: #{tpu_custom_call.1} parent=39 // pred_region
        %s2759 = smul.u32 87, %s15
        %p2760 = scmp.lt.s32.totalorder %s2759, 173
        %s2761 = scalar_select %p2760, %s2759, 173
        %s2762 = smul.addr %s2761, 8
        %s2763 = scalar_lea.vmem %s3, %s2762
      $region44: #{tpu_custom_call.1} parent=39 // pred_fallthru
        _
    $region40: #{tpu_custom_call.1} parent=5 // pred_fallthru
      _
  $region6: #{tpu_custom_call.1} parent=0 // loop_footer
    %s13 = sadd.s32 1, %s9
  $region7: #{tpu_custom_call.1} parent=0 // loop_footer_branch
    %8 = sbr.rel target = $region3
  $region8: #{tpu_custom_call.1} parent=0 // loop_exit
    _

</llo_original>
